<compile_context>
chip_gen: v7x
topology: tpu7x:2x2x1
jax: 0.10.0
libtpu: 0.0.40
codegen_flags: <defaults>
</compile_context>

<pallas_src>
import functools

import jax
import jax.numpy as jnp
from jax import lax
from jax.experimental import pallas as pl
from jax.experimental.pallas import tpu as pltpu  # noqa: F401

EPS = 1e-5


def fused_kernel(x_ref, p_ref, out_ref, *, k2, p_int, p_total, n_border):
    """x_ref: (2*C_in, P_lanes)  p_ref: (C_out, 2*C_in+4)  out_ref: (C_out, P_lanes)."""
    P_lanes = x_ref.shape[1]
    n_pad = P_lanes - p_int                 # zero lane-pad pixels (static)
    nb_eff = float(n_border - n_pad)        # remaining analytic border pixels
    inv_ptot = 1.0 / float(p_total)         # p_total = N*(H+2)*(W+2)

    params = p_ref[...]                     # single load of the packed slab
    bsum = params[:, k2:k2 + 1]             # b1 + b2
    A = params[:, k2 + 1:k2 + 2]            # g1 * g2
    B = params[:, k2 + 2:k2 + 3]            # g1*be2 + g2*be1
    Cc = params[:, k2 + 3:k2 + 4]           # be1 * be2

    # Fused 1x1 convolutions: K = 2*C_in VPU broadcast-FMAs (unrolled).
    acc = params[:, 0:1] * x_ref[0:1, :]
    for k in range(1, k2):
        acc = acc + params[:, k:k + 1] * x_ref[k:k + 1, :]
    v3 = acc + bsum                         # (C_out, P_lanes); pad lanes == bsum

    # One-pass batch statistics over all N*(H+2)*(W+2) pixels of the conv
    # output: real border pixels and lane-pad pixels both equal bsum/channel.
    s1 = jnp.sum(v3, axis=1, keepdims=True) + nb_eff * bsum
    s2 = jnp.sum(v3 * v3, axis=1, keepdims=True) + nb_eff * (bsum * bsum)
    mean = s1 * inv_ptot
    var = s2 * inv_ptot - mean * mean       # biased variance (training mode)
    inv = lax.rsqrt(var + EPS)

    # Folded affine product: bn1(v3) * bn2(v3) = A*xhat^2 + B*xhat + C.
    xhat = (v3 - mean) * inv
    out_ref[...] = (A * xhat + B) * xhat + Cc


def model_forward(x1, x2, packed):
    N, C_in, H, W = x1.shape
    Hp, Wp = H + 2, W + 2                   # padding=1 with a 1x1 conv grows spatial dims
    C_out = packed.shape[0]
    k2 = 2 * C_in
    P_int = N * H * W
    n_border = N * (Hp * Wp - H * W)
    # Lane extent: multiple of 128 with at least one zero-pad lane (it carries
    # the per-channel border constant on output).
    P_lanes = ((P_int + 1 + 127) // 128) * 128

    def to_cp(x):
        x = x.astype(jnp.float32)
        if N == 1:
            return x.reshape(C_in, P_int)                       # free reshape
        return jnp.transpose(x, (1, 0, 2, 3)).reshape(C_in, P_int)

    xcat = jnp.concatenate([to_cp(x1), to_cp(x2)], axis=0)      # (2*C_in, P_int)
    xcat = jnp.pad(xcat, ((0, 0), (0, P_lanes - P_int)))        # zero lane-pad

    def full(shape):
        return pl.BlockSpec(shape, lambda: (0,) * len(shape))

    out = pl.pallas_call(
        functools.partial(fused_kernel, k2=k2, p_int=P_int,
                          p_total=N * Hp * Wp, n_border=n_border),
        out_shape=jax.ShapeDtypeStruct((C_out, P_lanes), jnp.float32),
        in_specs=[full((k2, P_lanes)), full((C_out, k2 + 4))],
        out_specs=full((C_out, P_lanes)),
    )(xcat, packed)

    # Assemble (N, C_out, Hp, Wp): border is a per-channel constant (read from
    # a pad lane); the interior is the lane-dense kernel output.
    border = out[:, P_int:P_int + 1]                            # (C_out, 1)
    interior = out[:, :P_int]
    if N == 1:
        interior = interior.reshape(1, C_out, H, W)             # free reshape
    else:
        interior = jnp.transpose(interior.reshape(C_out, N, H, W), (1, 0, 2, 3))
    full_out = jnp.broadcast_to(border.reshape(1, C_out, 1, 1), (N, C_out, Hp, Wp))
    return full_out.at[:, :, 1:H + 1, 1:W + 1].set(interior)


def reference_forward(x1, x2, raw):
    """Pure-JAX reference (explicit padding, two-pass BN, unfused affines)."""
    def conv1x1_pad1(x, w, b):
        xp = jnp.pad(x, ((0, 0), (0, 0), (1, 1), (1, 1)))
        return jnp.einsum('nchw,oc->nohw', xp, w) + b.reshape(1, -1, 1, 1)

    v1 = conv1x1_pad1(x1, raw["w1"], raw["b1"])
    v2 = conv1x1_pad1(x2, raw["w2"], raw["b2"])
    v3 = v1 + v2
    mean = jnp.mean(v3, axis=(0, 2, 3), keepdims=True)
    var = jnp.mean((v3 - mean) ** 2, axis=(0, 2, 3), keepdims=True)
    xhat = (v3 - mean) * lax.rsqrt(var + EPS)
    v4 = xhat * raw["g1"].reshape(1, -1, 1, 1) + raw["be1"].reshape(1, -1, 1, 1)
    v5 = xhat * raw["g2"].reshape(1, -1, 1, 1) + raw["be2"].reshape(1, -1, 1, 1)
    return v4 * v5


def make_params(key, c_in=3, c_out=8):
    ks = jax.random.split(key, 8)
    return dict(
        w1=jax.random.normal(ks[0], (c_out, c_in), jnp.float32) * 0.2,
        b1=jax.random.normal(ks[1], (c_out,), jnp.float32) * 0.1,
        w2=jax.random.normal(ks[2], (c_out, c_in), jnp.float32) * 0.2,
        b2=jax.random.normal(ks[3], (c_out,), jnp.float32) * 0.1,
        g1=1.0 + 0.1 * jax.random.normal(ks[4], (c_out,), jnp.float32),
        be1=0.1 * jax.random.normal(ks[5], (c_out,), jnp.float32),
        g2=1.0 + 0.1 * jax.random.normal(ks[6], (c_out,), jnp.float32),
        be2=0.1 * jax.random.normal(ks[7], (c_out,), jnp.float32),
    )


def pack_params(raw):
    """Single (C_out, 2*C_in+4) slab: [w1 | w2 | b1+b2 | g1*g2 | g1*be2+g2*be1 | be1*be2]."""
    bsum = raw["b1"] + raw["b2"]
    A = raw["g1"] * raw["g2"]
    B = raw["g1"] * raw["be2"] + raw["g2"] * raw["be1"]
    C = raw["be1"] * raw["be2"]
    extras = jnp.stack([bsum, A, B, C], axis=1)                  # (C_out, 4)
    return jnp.concatenate([raw["w1"], raw["w2"], extras], axis=1)


if __name__ == "__main__":
    key = jax.random.PRNGKey(0)
    k_in1, k_in2, k_p = jax.random.split(key, 3)

    # Shapes from the module spec: N=1, C_in=3, spatial 64x64 (still small).
    x1 = jax.random.normal(k_in1, (1, 3, 64, 64), jnp.float32)
    x2 = jax.random.normal(k_in2, (1, 3, 64, 64), jnp.float32)
    raw = make_params(k_p)
    packed = pack_params(raw)

    out = jax.block_until_ready(model_forward(x1, x2, packed))

    ref = reference_forward(x1, x2, raw)
    assert out.shape == (1, 8, 66, 66), out.shape
    max_err = float(jnp.max(jnp.abs(out - ref)))
    assert jnp.allclose(out, ref, atol=1e-4, rtol=1e-4), max_err

    print("KERNEL_OK")
</pallas_src>

<mosaic_0001>
module attributes {stable_mosaic.version = 11 : i64} {
  func.func @fused_kernel(%arg0: memref<6x4224xf32, #tpu.memory_space<vmem>>, %arg1: memref<8x10xf32, #tpu.memory_space<vmem>>, %arg2: memref<8x4224xf32, #tpu.memory_space<vmem>>) attributes {dimension_semantics = [], scalar_prefetch = 0 : i64, scratch_operands = 0 : i64, tpu.core_type = #tpu.core_type<tc>} {
    %c0 = arith.constant 0 : index
    %c0_0 = arith.constant 0 : index
    %0 = vector.load %arg1[%c0, %c0_0] : memref<8x10xf32, #tpu.memory_space<vmem>>, vector<8x10xf32>
    %1 = vector.extract_strided_slice %0 {offsets = [0, 6], sizes = [8, 1], strides = [1, 1]} : vector<8x10xf32> to vector<8x1xf32>
    %2 = vector.extract_strided_slice %0 {offsets = [0, 7], sizes = [8, 1], strides = [1, 1]} : vector<8x10xf32> to vector<8x1xf32>
    %3 = vector.extract_strided_slice %0 {offsets = [0, 8], sizes = [8, 1], strides = [1, 1]} : vector<8x10xf32> to vector<8x1xf32>
    %4 = vector.extract_strided_slice %0 {offsets = [0, 9], sizes = [8, 1], strides = [1, 1]} : vector<8x10xf32> to vector<8x1xf32>
    %5 = vector.extract_strided_slice %0 {offsets = [0, 0], sizes = [8, 1], strides = [1, 1]} : vector<8x10xf32> to vector<8x1xf32>
    %c0_1 = arith.constant 0 : index
    %c0_2 = arith.constant 0 : index
    %6 = vector.load %arg0[%c0_1, %c0_2] : memref<6x4224xf32, #tpu.memory_space<vmem>>, vector<1x4224xf32>
    %7 = vector.broadcast %5 : vector<8x1xf32> to vector<8x4224xf32>
    %8 = vector.broadcast %6 : vector<1x4224xf32> to vector<8x4224xf32>
    %9 = arith.mulf %7, %8 : vector<8x4224xf32>
    %10 = vector.extract_strided_slice %0 {offsets = [0, 1], sizes = [8, 1], strides = [1, 1]} : vector<8x10xf32> to vector<8x1xf32>
    %c1 = arith.constant 1 : index
    %c0_3 = arith.constant 0 : index
    %11 = vector.load %arg0[%c1, %c0_3] : memref<6x4224xf32, #tpu.memory_space<vmem>>, vector<1x4224xf32>
    %12 = vector.broadcast %10 : vector<8x1xf32> to vector<8x4224xf32>
    %13 = vector.broadcast %11 : vector<1x4224xf32> to vector<8x4224xf32>
    %14 = arith.mulf %12, %13 : vector<8x4224xf32>
    %15 = arith.addf %9, %14 : vector<8x4224xf32>
    %16 = vector.extract_strided_slice %0 {offsets = [0, 2], sizes = [8, 1], strides = [1, 1]} : vector<8x10xf32> to vector<8x1xf32>
    %c2 = arith.constant 2 : index
    %c0_4 = arith.constant 0 : index
    %17 = vector.load %arg0[%c2, %c0_4] : memref<6x4224xf32, #tpu.memory_space<vmem>>, vector<1x4224xf32>
    %18 = vector.broadcast %16 : vector<8x1xf32> to vector<8x4224xf32>
    %19 = vector.broadcast %17 : vector<1x4224xf32> to vector<8x4224xf32>
    %20 = arith.mulf %18, %19 : vector<8x4224xf32>
    %21 = arith.addf %15, %20 : vector<8x4224xf32>
    %22 = vector.extract_strided_slice %0 {offsets = [0, 3], sizes = [8, 1], strides = [1, 1]} : vector<8x10xf32> to vector<8x1xf32>
    %c3 = arith.constant 3 : index
    %c0_5 = arith.constant 0 : index
    %23 = vector.load %arg0[%c3, %c0_5] : memref<6x4224xf32, #tpu.memory_space<vmem>>, vector<1x4224xf32>
    %24 = vector.broadcast %22 : vector<8x1xf32> to vector<8x4224xf32>
    %25 = vector.broadcast %23 : vector<1x4224xf32> to vector<8x4224xf32>
    %26 = arith.mulf %24, %25 : vector<8x4224xf32>
    %27 = arith.addf %21, %26 : vector<8x4224xf32>
    %28 = vector.extract_strided_slice %0 {offsets = [0, 4], sizes = [8, 1], strides = [1, 1]} : vector<8x10xf32> to vector<8x1xf32>
    %c4 = arith.constant 4 : index
    %c0_6 = arith.constant 0 : index
    %29 = vector.load %arg0[%c4, %c0_6] : memref<6x4224xf32, #tpu.memory_space<vmem>>, vector<1x4224xf32>
    %30 = vector.broadcast %28 : vector<8x1xf32> to vector<8x4224xf32>
    %31 = vector.broadcast %29 : vector<1x4224xf32> to vector<8x4224xf32>
    %32 = arith.mulf %30, %31 : vector<8x4224xf32>
    %33 = arith.addf %27, %32 : vector<8x4224xf32>
    %34 = vector.extract_strided_slice %0 {offsets = [0, 5], sizes = [8, 1], strides = [1, 1]} : vector<8x10xf32> to vector<8x1xf32>
    %c5 = arith.constant 5 : index
    %c0_7 = arith.constant 0 : index
    %35 = vector.load %arg0[%c5, %c0_7] : memref<6x4224xf32, #tpu.memory_space<vmem>>, vector<1x4224xf32>
    %36 = vector.broadcast %34 : vector<8x1xf32> to vector<8x4224xf32>
    %37 = vector.broadcast %35 : vector<1x4224xf32> to vector<8x4224xf32>
    %38 = arith.mulf %36, %37 : vector<8x4224xf32>
    %39 = arith.addf %33, %38 : vector<8x4224xf32>
    %40 = vector.broadcast %1 : vector<8x1xf32> to vector<8x4224xf32>
    %41 = arith.addf %39, %40 : vector<8x4224xf32>
    %cst = arith.constant dense<0.000000e+00> : vector<8xf32>
    %42 = vector.multi_reduction <add>, %41, %cst [1] : vector<8x4224xf32> to vector<8xf32>
    %43 = vector.shape_cast %42 : vector<8xf32> to vector<8x1xf32>
    %cst_8 = arith.constant 1.320000e+02 : f32
    %44 = vector.broadcast %cst_8 : f32 to vector<8x1xf32>
    %45 = arith.mulf %44, %1 : vector<8x1xf32>
    %46 = arith.addf %43, %45 : vector<8x1xf32>
    %47 = arith.mulf %41, %41 : vector<8x4224xf32>
    %cst_9 = arith.constant dense<0.000000e+00> : vector<8xf32>
    %48 = vector.multi_reduction <add>, %47, %cst_9 [1] : vector<8x4224xf32> to vector<8xf32>
    %49 = vector.shape_cast %48 : vector<8xf32> to vector<8x1xf32>
    %50 = arith.mulf %1, %1 : vector<8x1xf32>
    %cst_10 = arith.constant 1.320000e+02 : f32
    %51 = vector.broadcast %cst_10 : f32 to vector<8x1xf32>
    %52 = arith.mulf %51, %50 : vector<8x1xf32>
    %53 = arith.addf %49, %52 : vector<8x1xf32>
    %cst_11 = arith.constant 2.2956841E-4 : f32
    %54 = vector.broadcast %cst_11 : f32 to vector<8x1xf32>
    %55 = arith.mulf %46, %54 : vector<8x1xf32>
    %cst_12 = arith.constant 2.2956841E-4 : f32
    %56 = vector.broadcast %cst_12 : f32 to vector<8x1xf32>
    %57 = arith.mulf %53, %56 : vector<8x1xf32>
    %58 = arith.mulf %55, %55 : vector<8x1xf32>
    %59 = arith.subf %57, %58 : vector<8x1xf32>
    %cst_13 = arith.constant 9.99999974E-6 : f32
    %60 = vector.broadcast %cst_13 : f32 to vector<8x1xf32>
    %61 = arith.addf %59, %60 : vector<8x1xf32>
    %62 = math.rsqrt %61 : vector<8x1xf32>
    %63 = vector.broadcast %55 : vector<8x1xf32> to vector<8x4224xf32>
    %64 = arith.subf %41, %63 : vector<8x4224xf32>
    %65 = vector.broadcast %62 : vector<8x1xf32> to vector<8x4224xf32>
    %66 = arith.mulf %64, %65 : vector<8x4224xf32>
    %67 = vector.broadcast %2 : vector<8x1xf32> to vector<8x4224xf32>
    %68 = arith.mulf %67, %66 : vector<8x4224xf32>
    %69 = vector.broadcast %3 : vector<8x1xf32> to vector<8x4224xf32>
    %70 = arith.addf %68, %69 : vector<8x4224xf32>
    %71 = arith.mulf %70, %66 : vector<8x4224xf32>
    %72 = vector.broadcast %4 : vector<8x1xf32> to vector<8x4224xf32>
    %73 = arith.addf %71, %72 : vector<8x4224xf32>
    %c0_14 = arith.constant 0 : index
    %c0_15 = arith.constant 0 : index
    %74 = vector.load %arg2[%c0_14, %c0_15] : memref<8x4224xf32, #tpu.memory_space<vmem>>, vector<8x4224xf32>
    tpu.vector_store %arg2[%c0_14, %c0_15], %73 {strides = array<i32>} : memref<8x4224xf32, #tpu.memory_space<vmem>>, vector<8x4224xf32>,
    return
  }
}

</mosaic_0001>

<llo_original>
// kernel: tpu_custom_call.1
$region0: #{tpu_custom_call.1}
  #allocation0 [shape = 'u32[]', space=smem, size = 0x4, offset = 0x4, fixed_abs, tag = 'smem constant byte address 0x4 - core index']
  #allocation1 [shape = 'u32[144,128]{1,0:T(1,128)}', space=vmem, size = 0x12000, scoped, tag = 'internal scratch']
  %s0 = inlined_call_operand.hbm [shape: f32[6,4224], index: 0, kind: input, shape index: {}]
  %s1 = inlined_call_operand.hbm [shape: f32[8,10], index: 1, kind: input, shape index: {}]
  %s2 = inlined_call_operand.hbm [shape: f32[8,4224], index: 2, kind: output, shape index: {}]
  %s3 = sld [smem:[#allocation0]]
  $region26: #{tpu_custom_call.1} parent=0
    _
  %s5 = ssub.s32 1, %s3
  %s6 = scalar_select 0, %s5, %s3
  $region1: #{tpu_custom_call.1} parent=0
    #allocation2 [shape = 'u8[135168]{0}', space=vmem, size = 0x21000, scoped, tag = 'input window, operand 0, single buffered']
    #allocation3 [shape = 's32[1]{0}', space=sflag, size = 0x4, scoped, tag = 'scoped memory for tpu_custom_call.1']
    #allocation4 [shape = 's32[1]{0}', space=sflag, size = 0x4, scoped, tag = 'scoped memory for tpu_custom_call.1']
    #allocation5 [shape = 'u8[4096]{0}', space=vmem, size = 0x1000, scoped, tag = 'input window, operand 1, single buffered']
    #allocation6 [shape = 's32[1]{0}', space=sflag, size = 0x4, scoped, tag = 'scoped memory for tpu_custom_call.1']
    #allocation7 [shape = 'u8[135168]{0}', space=vmem, size = 0x21000, scoped, tag = 'output window, operand 0, single buffered']
    %7 = vsyncpa [#allocation3], 0
    %8 = vsyncpa [#allocation6], 0
    %9 = vsyncpa [#allocation4], 0
    // Predicated region
    $region2: #{tpu_custom_call.1} parent=1 // pred_check
      _
    $region3: #{tpu_custom_call.1} parent=1 // pred_check_branch
      %11 = sbr.rel (0) target = $region5
    $region4: #{tpu_custom_call.1} parent=1 // pred_region
      %s13 = ssub.s32 4224, 4224
      %14 = vsyncadd [#allocation3], %s13
      %s16 = sshll.u32 [#allocation2], 4
      %s17 = int_to_ptr.vmem [resolvable:$true] %s16
      %19 = dma.hbm_to_vmem [thread:$0]  %s0, 4224, %s17, [#allocation3]
    $region5: #{tpu_custom_call.1} parent=1 // pred_fallthru
      _
    // Predicated region
    $region6: #{tpu_custom_call.1} parent=1 // pred_check
      _
    $region7: #{tpu_custom_call.1} parent=1 // pred_check_branch
      %21 = sbr.rel (0) target = $region9
    $region8: #{tpu_custom_call.1} parent=1 // pred_region
      %s23 = ssub.s32 128, 128
      %24 = vsyncadd [#allocation6], %s23
      %s26 = sshll.u32 [#allocation5], 4
      %s27 = int_to_ptr.vmem [resolvable:$true] %s26
      %29 = dma.hbm_to_vmem [thread:$0]  %s1, 128, %s27, [#allocation6]
    $region9: #{tpu_custom_call.1} parent=1 // pred_fallthru
      _
    // Predicated region
    $region10: #{tpu_custom_call.1} parent=1 // pred_check
      _
    $region11: #{tpu_custom_call.1} parent=1 // pred_check_branch
      %31 = sbr.rel (0) target = $region13
    $region12: #{tpu_custom_call.1} parent=1 // pred_region
      %32 = dma.done [#allocation3], 4224
    $region13: #{tpu_custom_call.1} parent=1 // pred_fallthru
      _
    // Predicated region
    $region14: #{tpu_custom_call.1} parent=1 // pred_check
      _
    $region15: #{tpu_custom_call.1} parent=1 // pred_check_branch
      %34 = sbr.rel (0) target = $region17
    $region16: #{tpu_custom_call.1} parent=1 // pred_region
      %35 = dma.done [#allocation6], 128
    $region17: #{tpu_custom_call.1} parent=1 // pred_fallthru
      _
    %v36 = vld [vmem:[#allocation5] sm:$0xff]
    %v37 = vld [vmem:[#allocation2] ss:$8 sm:$0xf]
    %v38 = vld [vmem:[#allocation2] ss:$8 sm:$0xf0]
    %v39 = vor.u32 %v37, %v38
    %s40 = scalar_lea.vmem [#allocation2], 64
    %v41 = vld [vmem:[%s40] ss:$8 sm:$0xf]
    %v42 = vld [vmem:[%s40] ss:$8 sm:$0xf0]
    %v43 = vor.u32 %v41, %v42
    %s44 = scalar_lea.vmem [#allocation2], 128
    %v45 = vld [vmem:[%s44] ss:$8 sm:$0xf]
    %v46 = vld [vmem:[%s44] ss:$8 sm:$0xf0]
    %v47 = vor.u32 %v45, %v46
    %s48 = scalar_lea.vmem [#allocation2], 192
    %v49 = vld [vmem:[%s48] ss:$8 sm:$0xf]
    %v50 = vld [vmem:[%s48] ss:$8 sm:$0xf0]
    %v51 = vor.u32 %v49, %v50
    %s52 = scalar_lea.vmem [#allocation2], 256
    %v53 = vld [vmem:[%s52] ss:$8 sm:$0x1]
    %55 = vset.pattern.permute.xlu0 0
    %56 = vperm.xlu0 %55, %v36
    %v57 = vpop.permute.xlu0 %56
    %v64 = vlaneseq
    %v65 = vshrl.u32 %v64, 7
    %v66 = vsub.s32 0, %v65
    %v67 = vrot.slane %v39, %v66
    %v68 = vlaneseq
    %v69 = vshrl.u32 %v68, 7
    %v70 = vsub.s32 1, %v69
    %v71 = vrot.slane %v39, %v70
    %v72 = vlaneseq
    %v73 = vshrl.u32 %v72, 7
    %v74 = vsub.s32 2, %v73
    %v75 = vrot.slane %v39, %v74
    %v76 = vlaneseq
    %v77 = vshrl.u32 %v76, 7
    %v78 = vsub.s32 3, %v77
    %v79 = vrot.slane %v39, %v78
    %v80 = vlaneseq
    %v81 = vshrl.u32 %v80, 7
    %v82 = vsub.s32 4, %v81
    %v83 = vrot.slane %v39, %v82
    %v84 = vlaneseq
    %v85 = vshrl.u32 %v84, 7
    %v86 = vsub.s32 5, %v85
    %v87 = vrot.slane %v39, %v86
    %v88 = vlaneseq
    %v89 = vshrl.u32 %v88, 7
    %v90 = vsub.s32 6, %v89
    %v91 = vrot.slane %v39, %v90
    %v92 = vlaneseq
    %v93 = vshrl.u32 %v92, 7
    %v94 = vsub.s32 7, %v93
    %v95 = vrot.slane %v39, %v94
    %v96 = vlaneseq
    %v97 = vshrl.u32 %v96, 7
    %v98 = vsub.s32 0, %v97
    %v99 = vrot.slane %v43, %v98
    %v100 = vlaneseq
    %v101 = vshrl.u32 %v100, 7
    %v102 = vsub.s32 1, %v101
    %v103 = vrot.slane %v43, %v102
    %v104 = vlaneseq
    %v105 = vshrl.u32 %v104, 7
    %v106 = vsub.s32 2, %v105
    %v107 = vrot.slane %v43, %v106
    %v108 = vlaneseq
    %v109 = vshrl.u32 %v108, 7
    %v110 = vsub.s32 3, %v109
    %v111 = vrot.slane %v43, %v110
    %v112 = vlaneseq
    %v113 = vshrl.u32 %v112, 7
    %v114 = vsub.s32 4, %v113
    %v115 = vrot.slane %v43, %v114
    %v116 = vlaneseq
    %v117 = vshrl.u32 %v116, 7
    %v118 = vsub.s32 5, %v117
    %v119 = vrot.slane %v43, %v118
    %v120 = vlaneseq
    %v121 = vshrl.u32 %v120, 7
    %v122 = vsub.s32 6, %v121
    %v123 = vrot.slane %v43, %v122
    %v124 = vlaneseq
    %v125 = vshrl.u32 %v124, 7
    %v126 = vsub.s32 7, %v125
    %v127 = vrot.slane %v43, %v126
    %v128 = vlaneseq
    %v129 = vshrl.u32 %v128, 7
    %v130 = vsub.s32 0, %v129
    %v131 = vrot.slane %v47, %v130
    %v132 = vlaneseq
    %v133 = vshrl.u32 %v132, 7
    %v134 = vsub.s32 1, %v133
    %v135 = vrot.slane %v47, %v134
    %v136 = vlaneseq
    %v137 = vshrl.u32 %v136, 7
    %v138 = vsub.s32 2, %v137
    %v139 = vrot.slane %v47, %v138
    %v140 = vlaneseq
    %v141 = vshrl.u32 %v140, 7
    %v142 = vsub.s32 3, %v141
    %v143 = vrot.slane %v47, %v142
    %v144 = vlaneseq
    %v145 = vshrl.u32 %v144, 7
    %v146 = vsub.s32 4, %v145
    %v147 = vrot.slane %v47, %v146
    %v148 = vlaneseq
    %v149 = vshrl.u32 %v148, 7
    %v150 = vsub.s32 5, %v149
    %v151 = vrot.slane %v47, %v150
    %v152 = vlaneseq
    %v153 = vshrl.u32 %v152, 7
    %v154 = vsub.s32 6, %v153
    %v155 = vrot.slane %v47, %v154
    %v156 = vlaneseq
    %v157 = vshrl.u32 %v156, 7
    %v158 = vsub.s32 7, %v157
    %v159 = vrot.slane %v47, %v158
    %v160 = vlaneseq
    %v161 = vshrl.u32 %v160, 7
    %v162 = vsub.s32 0, %v161
    %v163 = vrot.slane %v51, %v162
    %v164 = vlaneseq
    %v165 = vshrl.u32 %v164, 7
    %v166 = vsub.s32 1, %v165
    %v167 = vrot.slane %v51, %v166
    %v168 = vlaneseq
    %v169 = vshrl.u32 %v168, 7
    %v170 = vsub.s32 2, %v169
    %v171 = vrot.slane %v51, %v170
    %v172 = vlaneseq
    %v173 = vshrl.u32 %v172, 7
    %v174 = vsub.s32 3, %v173
    %v175 = vrot.slane %v51, %v174
    %v176 = vlaneseq
    %v177 = vshrl.u32 %v176, 7
    %v178 = vsub.s32 4, %v177
    %v179 = vrot.slane %v51, %v178
    %v180 = vlaneseq
    %v181 = vshrl.u32 %v180, 7
    %v182 = vsub.s32 5, %v181
    %v183 = vrot.slane %v51, %v182
    %v184 = vlaneseq
    %v185 = vshrl.u32 %v184, 7
    %v186 = vsub.s32 6, %v185
    %v187 = vrot.slane %v51, %v186
    %v188 = vlaneseq
    %v189 = vshrl.u32 %v188, 7
    %v190 = vsub.s32 7, %v189
    %v191 = vrot.slane %v51, %v190
    %v192 = vlaneseq
    %v193 = vshrl.u32 %v192, 7
    %v194 = vsub.s32 0, %v193
    %v195 = vrot.slane %v53, %v194
    %v229 = vmul.f32 %v57, %v67
    %v230 = vmul.f32 %v57, %v71
    %v231 = vmul.f32 %v57, %v75
    %v232 = vmul.f32 %v57, %v79
    %v233 = vmul.f32 %v57, %v83
    %v234 = vmul.f32 %v57, %v87
    %v235 = vmul.f32 %v57, %v91
    %v236 = vmul.f32 %v57, %v95
    %v237 = vmul.f32 %v57, %v99
    %v238 = vmul.f32 %v57, %v103
    %v239 = vmul.f32 %v57, %v107
    %v240 = vmul.f32 %v57, %v111
    %v241 = vmul.f32 %v57, %v115
    %v242 = vmul.f32 %v57, %v119
    %v243 = vmul.f32 %v57, %v123
    %v244 = vmul.f32 %v57, %v127
    %v245 = vmul.f32 %v57, %v131
    %v246 = vmul.f32 %v57, %v135
    %v247 = vmul.f32 %v57, %v139
    %v248 = vmul.f32 %v57, %v143
    %v249 = vmul.f32 %v57, %v147
    %v250 = vmul.f32 %v57, %v151
    %v251 = vmul.f32 %v57, %v155
    %v252 = vmul.f32 %v57, %v159
    %v253 = vmul.f32 %v57, %v163
    %v254 = vmul.f32 %v57, %v167
    %v255 = vmul.f32 %v57, %v171
    %v256 = vmul.f32 %v57, %v175
    %v257 = vmul.f32 %v57, %v179
    %v258 = vmul.f32 %v57, %v183
    %v259 = vmul.f32 %v57, %v187
    %v260 = vmul.f32 %v57, %v191
    %v261 = vmul.f32 %v57, %v195
    %s262 = scalar_lea.vmem [#allocation2], 1
    %v263 = vld [vmem:[%s262] ss:$8 sm:$0xf]
    %v264 = vld [vmem:[%s262] ss:$8 sm:$0xf0]
    %v265 = vor.u32 %v263, %v264
    %s266 = scalar_lea.vmem [#allocation2], 65
    %v267 = vld [vmem:[%s266] ss:$8 sm:$0xf]
    %v268 = vld [vmem:[%s266] ss:$8 sm:$0xf0]
    %v269 = vor.u32 %v267, %v268
    %s270 = scalar_lea.vmem [#allocation2], 129
    %v271 = vld [vmem:[%s270] ss:$8 sm:$0xf]
    %v272 = vld [vmem:[%s270] ss:$8 sm:$0xf0]
    %v273 = vor.u32 %v271, %v272
    %s274 = scalar_lea.vmem [#allocation2], 193
    %v275 = vld [vmem:[%s274] ss:$8 sm:$0xf]
    %v276 = vld [vmem:[%s274] ss:$8 sm:$0xf0]
    %v277 = vor.u32 %v275, %v276
    %s278 = scalar_lea.vmem [#allocation2], 257
    %v279 = vld [vmem:[%s278] ss:$8 sm:$0x1]
    %280 = vset.pattern.permute.xlu0 1
    %281 = vperm.xlu0 %280, %v36
    %v282 = vpop.permute.xlu0 %281
    %v289 = vlaneseq
    %v290 = vshrl.u32 %v289, 7
    %v291 = vsub.s32 0, %v290
    %v292 = vrot.slane %v265, %v291
    %v293 = vlaneseq
    %v294 = vshrl.u32 %v293, 7
    %v295 = vsub.s32 1, %v294
    %v296 = vrot.slane %v265, %v295
    %v297 = vlaneseq
    %v298 = vshrl.u32 %v297, 7
    %v299 = vsub.s32 2, %v298
    %v300 = vrot.slane %v265, %v299
    %v301 = vlaneseq
    %v302 = vshrl.u32 %v301, 7
    %v303 = vsub.s32 3, %v302
    %v304 = vrot.slane %v265, %v303
    %v305 = vlaneseq
    %v306 = vshrl.u32 %v305, 7
    %v307 = vsub.s32 4, %v306
    %v308 = vrot.slane %v265, %v307
    %v309 = vlaneseq
    %v310 = vshrl.u32 %v309, 7
    %v311 = vsub.s32 5, %v310
    %v312 = vrot.slane %v265, %v311
    %v313 = vlaneseq
    %v314 = vshrl.u32 %v313, 7
    %v315 = vsub.s32 6, %v314
    %v316 = vrot.slane %v265, %v315
    %v317 = vlaneseq
    %v318 = vshrl.u32 %v317, 7
    %v319 = vsub.s32 7, %v318
    %v320 = vrot.slane %v265, %v319
    %v321 = vlaneseq
    %v322 = vshrl.u32 %v321, 7
    %v323 = vsub.s32 0, %v322
    %v324 = vrot.slane %v269, %v323
    %v325 = vlaneseq
    %v326 = vshrl.u32 %v325, 7
    %v327 = vsub.s32 1, %v326
    %v328 = vrot.slane %v269, %v327
    %v329 = vlaneseq
    %v330 = vshrl.u32 %v329, 7
    %v331 = vsub.s32 2, %v330
    %v332 = vrot.slane %v269, %v331
    %v333 = vlaneseq
    %v334 = vshrl.u32 %v333, 7
    %v335 = vsub.s32 3, %v334
    %v336 = vrot.slane %v269, %v335
    %v337 = vlaneseq
    %v338 = vshrl.u32 %v337, 7
    %v339 = vsub.s32 4, %v338
    %v340 = vrot.slane %v269, %v339
    %v341 = vlaneseq
    %v342 = vshrl.u32 %v341, 7
    %v343 = vsub.s32 5, %v342
    %v344 = vrot.slane %v269, %v343
    %v345 = vlaneseq
    %v346 = vshrl.u32 %v345, 7
    %v347 = vsub.s32 6, %v346
    %v348 = vrot.slane %v269, %v347
    %v349 = vlaneseq
    %v350 = vshrl.u32 %v349, 7
    %v351 = vsub.s32 7, %v350
    %v352 = vrot.slane %v269, %v351
    %v353 = vlaneseq
    %v354 = vshrl.u32 %v353, 7
    %v355 = vsub.s32 0, %v354
    %v356 = vrot.slane %v273, %v355
    %v357 = vlaneseq
    %v358 = vshrl.u32 %v357, 7
    %v359 = vsub.s32 1, %v358
    %v360 = vrot.slane %v273, %v359
    %v361 = vlaneseq
    %v362 = vshrl.u32 %v361, 7
    %v363 = vsub.s32 2, %v362
    %v364 = vrot.slane %v273, %v363
    %v365 = vlaneseq
    %v366 = vshrl.u32 %v365, 7
    %v367 = vsub.s32 3, %v366
    %v368 = vrot.slane %v273, %v367
    %v369 = vlaneseq
    %v370 = vshrl.u32 %v369, 7
    %v371 = vsub.s32 4, %v370
    %v372 = vrot.slane %v273, %v371
    %v373 = vlaneseq
    %v374 = vshrl.u32 %v373, 7
    %v375 = vsub.s32 5, %v374
    %v376 = vrot.slane %v273, %v375
    %v377 = vlaneseq
    %v378 = vshrl.u32 %v377, 7
    %v379 = vsub.s32 6, %v378
    %v380 = vrot.slane %v273, %v379
    %v381 = vlaneseq
    %v382 = vshrl.u32 %v381, 7
    %v383 = vsub.s32 7, %v382
    %v384 = vrot.slane %v273, %v383
    %v385 = vlaneseq
    %v386 = vshrl.u32 %v385, 7
    %v387 = vsub.s32 0, %v386
    %v388 = vrot.slane %v277, %v387
    %v389 = vlaneseq
    %v390 = vshrl.u32 %v389, 7
    %v391 = vsub.s32 1, %v390
    %v392 = vrot.slane %v277, %v391
    %v393 = vlaneseq
    %v394 = vshrl.u32 %v393, 7
    %v395 = vsub.s32 2, %v394
    %v396 = vrot.slane %v277, %v395
    %v397 = vlaneseq
    %v398 = vshrl.u32 %v397, 7
    %v399 = vsub.s32 3, %v398
    %v400 = vrot.slane %v277, %v399
    %v401 = vlaneseq
    %v402 = vshrl.u32 %v401, 7
    %v403 = vsub.s32 4, %v402
    %v404 = vrot.slane %v277, %v403
    %v405 = vlaneseq
    %v406 = vshrl.u32 %v405, 7
    %v407 = vsub.s32 5, %v406
    %v408 = vrot.slane %v277, %v407
    %v409 = vlaneseq
    %v410 = vshrl.u32 %v409, 7
    %v411 = vsub.s32 6, %v410
    %v412 = vrot.slane %v277, %v411
    %v413 = vlaneseq
    %v414 = vshrl.u32 %v413, 7
    %v415 = vsub.s32 7, %v414
    %v416 = vrot.slane %v277, %v415
    %v417 = vlaneseq
    %v418 = vshrl.u32 %v417, 7
    %v419 = vsub.s32 0, %v418
    %v420 = vrot.slane %v279, %v419
    %v454 = vmul.f32 %v282, %v292
    %v455 = vmul.f32 %v282, %v296
    %v456 = vmul.f32 %v282, %v300
    %v457 = vmul.f32 %v282, %v304
    %v458 = vmul.f32 %v282, %v308
    %v459 = vmul.f32 %v282, %v312
    %v460 = vmul.f32 %v282, %v316
    %v461 = vmul.f32 %v282, %v320
    %v462 = vmul.f32 %v282, %v324
    %v463 = vmul.f32 %v282, %v328
    %v464 = vmul.f32 %v282, %v332
    %v465 = vmul.f32 %v282, %v336
    %v466 = vmul.f32 %v282, %v340
    %v467 = vmul.f32 %v282, %v344
    %v468 = vmul.f32 %v282, %v348
    %v469 = vmul.f32 %v282, %v352
    %v470 = vmul.f32 %v282, %v356
    %v471 = vmul.f32 %v282, %v360
    %v472 = vmul.f32 %v282, %v364
    %v473 = vmul.f32 %v282, %v368
    %v474 = vmul.f32 %v282, %v372
    %v475 = vmul.f32 %v282, %v376
    %v476 = vmul.f32 %v282, %v380
    %v477 = vmul.f32 %v282, %v384
    %v478 = vmul.f32 %v282, %v388
    %v479 = vmul.f32 %v282, %v392
    %v480 = vmul.f32 %v282, %v396
    %v481 = vmul.f32 %v282, %v400
    %v482 = vmul.f32 %v282, %v404
    %v483 = vmul.f32 %v282, %v408
    %v484 = vmul.f32 %v282, %v412
    %v485 = vmul.f32 %v282, %v416
    %v486 = vmul.f32 %v282, %v420
    %v487 = vadd.f32 %v229, %v454
    %v488 = vadd.f32 %v230, %v455
    %v489 = vadd.f32 %v231, %v456
    %v490 = vadd.f32 %v232, %v457
    %v491 = vadd.f32 %v233, %v458
    %v492 = vadd.f32 %v234, %v459
    %v493 = vadd.f32 %v235, %v460
    %v494 = vadd.f32 %v236, %v461
    %v495 = vadd.f32 %v237, %v462
    %v496 = vadd.f32 %v238, %v463
    %v497 = vadd.f32 %v239, %v464
    %v498 = vadd.f32 %v240, %v465
    %v499 = vadd.f32 %v241, %v466
    %v500 = vadd.f32 %v242, %v467
    %v501 = vadd.f32 %v243, %v468
    %v502 = vadd.f32 %v244, %v469
    %v503 = vadd.f32 %v245, %v470
    %v504 = vadd.f32 %v246, %v471
    %v505 = vadd.f32 %v247, %v472
    %v506 = vadd.f32 %v248, %v473
    %v507 = vadd.f32 %v249, %v474
    %v508 = vadd.f32 %v250, %v475
    %v509 = vadd.f32 %v251, %v476
    %v510 = vadd.f32 %v252, %v477
    %v511 = vadd.f32 %v253, %v478
    %v512 = vadd.f32 %v254, %v479
    %v513 = vadd.f32 %v255, %v480
    %v514 = vadd.f32 %v256, %v481
    %v515 = vadd.f32 %v257, %v482
    %v516 = vadd.f32 %v258, %v483
    %v517 = vadd.f32 %v259, %v484
    %v518 = vadd.f32 %v260, %v485
    %v519 = vadd.f32 %v261, %v486
    %s520 = scalar_lea.vmem [#allocation2], 2
    %v521 = vld [vmem:[%s520] ss:$8 sm:$0xf]
    %v522 = vld [vmem:[%s520] ss:$8 sm:$0xf0]
    %v523 = vor.u32 %v521, %v522
    %s524 = scalar_lea.vmem [#allocation2], 66
    %v525 = vld [vmem:[%s524] ss:$8 sm:$0xf]
    %v526 = vld [vmem:[%s524] ss:$8 sm:$0xf0]
    %v527 = vor.u32 %v525, %v526
    %s528 = scalar_lea.vmem [#allocation2], 130
    %v529 = vld [vmem:[%s528] ss:$8 sm:$0xf]
    %v530 = vld [vmem:[%s528] ss:$8 sm:$0xf0]
    %v531 = vor.u32 %v529, %v530
    %s532 = scalar_lea.vmem [#allocation2], 194
    %v533 = vld [vmem:[%s532] ss:$8 sm:$0xf]
    %v534 = vld [vmem:[%s532] ss:$8 sm:$0xf0]
    %v535 = vor.u32 %v533, %v534
    %s536 = scalar_lea.vmem [#allocation2], 258
    %v537 = vld [vmem:[%s536] ss:$8 sm:$0x1]
    %538 = vset.pattern.permute.xlu0 2
    %539 = vperm.xlu0 %538, %v36
    %v540 = vpop.permute.xlu0 %539
    %v547 = vlaneseq
    %v548 = vshrl.u32 %v547, 7
    %v549 = vsub.s32 0, %v548
    %v550 = vrot.slane %v523, %v549
    %v551 = vlaneseq
    %v552 = vshrl.u32 %v551, 7
    %v553 = vsub.s32 1, %v552
    %v554 = vrot.slane %v523, %v553
    %v555 = vlaneseq
    %v556 = vshrl.u32 %v555, 7
    %v557 = vsub.s32 2, %v556
    %v558 = vrot.slane %v523, %v557
    %v559 = vlaneseq
    %v560 = vshrl.u32 %v559, 7
    %v561 = vsub.s32 3, %v560
    %v562 = vrot.slane %v523, %v561
    %v563 = vlaneseq
    %v564 = vshrl.u32 %v563, 7
    %v565 = vsub.s32 4, %v564
    %v566 = vrot.slane %v523, %v565
    %v567 = vlaneseq
    %v568 = vshrl.u32 %v567, 7
    %v569 = vsub.s32 5, %v568
    %v570 = vrot.slane %v523, %v569
    %v571 = vlaneseq
    %v572 = vshrl.u32 %v571, 7
    %v573 = vsub.s32 6, %v572
    %v574 = vrot.slane %v523, %v573
    %v575 = vlaneseq
    %v576 = vshrl.u32 %v575, 7
    %v577 = vsub.s32 7, %v576
    %v578 = vrot.slane %v523, %v577
    %v579 = vlaneseq
    %v580 = vshrl.u32 %v579, 7
    %v581 = vsub.s32 0, %v580
    %v582 = vrot.slane %v527, %v581
    %v583 = vlaneseq
    %v584 = vshrl.u32 %v583, 7
    %v585 = vsub.s32 1, %v584
    %v586 = vrot.slane %v527, %v585
    %v587 = vlaneseq
    %v588 = vshrl.u32 %v587, 7
    %v589 = vsub.s32 2, %v588
    %v590 = vrot.slane %v527, %v589
    %v591 = vlaneseq
    %v592 = vshrl.u32 %v591, 7
    %v593 = vsub.s32 3, %v592
    %v594 = vrot.slane %v527, %v593
    %v595 = vlaneseq
    %v596 = vshrl.u32 %v595, 7
    %v597 = vsub.s32 4, %v596
    %v598 = vrot.slane %v527, %v597
    %v599 = vlaneseq
    %v600 = vshrl.u32 %v599, 7
    %v601 = vsub.s32 5, %v600
    %v602 = vrot.slane %v527, %v601
    %v603 = vlaneseq
    %v604 = vshrl.u32 %v603, 7
    %v605 = vsub.s32 6, %v604
    %v606 = vrot.slane %v527, %v605
    %v607 = vlaneseq
    %v608 = vshrl.u32 %v607, 7
    %v609 = vsub.s32 7, %v608
    %v610 = vrot.slane %v527, %v609
    %v611 = vlaneseq
    %v612 = vshrl.u32 %v611, 7
    %v613 = vsub.s32 0, %v612
    %v614 = vrot.slane %v531, %v613
    %v615 = vlaneseq
    %v616 = vshrl.u32 %v615, 7
    %v617 = vsub.s32 1, %v616
    %v618 = vrot.slane %v531, %v617
    %v619 = vlaneseq
    %v620 = vshrl.u32 %v619, 7
    %v621 = vsub.s32 2, %v620
    %v622 = vrot.slane %v531, %v621
    %v623 = vlaneseq
    %v624 = vshrl.u32 %v623, 7
    %v625 = vsub.s32 3, %v624
    %v626 = vrot.slane %v531, %v625
    %v627 = vlaneseq
    %v628 = vshrl.u32 %v627, 7
    %v629 = vsub.s32 4, %v628
    %v630 = vrot.slane %v531, %v629
    %v631 = vlaneseq
    %v632 = vshrl.u32 %v631, 7
    %v633 = vsub.s32 5, %v632
    %v634 = vrot.slane %v531, %v633
    %v635 = vlaneseq
    %v636 = vshrl.u32 %v635, 7
    %v637 = vsub.s32 6, %v636
    %v638 = vrot.slane %v531, %v637
    %v639 = vlaneseq
    %v640 = vshrl.u32 %v639, 7
    %v641 = vsub.s32 7, %v640
    %v642 = vrot.slane %v531, %v641
    %v643 = vlaneseq
    %v644 = vshrl.u32 %v643, 7
    %v645 = vsub.s32 0, %v644
    %v646 = vrot.slane %v535, %v645
    %v647 = vlaneseq
    %v648 = vshrl.u32 %v647, 7
    %v649 = vsub.s32 1, %v648
    %v650 = vrot.slane %v535, %v649
    %v651 = vlaneseq
    %v652 = vshrl.u32 %v651, 7
    %v653 = vsub.s32 2, %v652
    %v654 = vrot.slane %v535, %v653
    %v655 = vlaneseq
    %v656 = vshrl.u32 %v655, 7
    %v657 = vsub.s32 3, %v656
    %v658 = vrot.slane %v535, %v657
    %v659 = vlaneseq
    %v660 = vshrl.u32 %v659, 7
    %v661 = vsub.s32 4, %v660
    %v662 = vrot.slane %v535, %v661
    %v663 = vlaneseq
    %v664 = vshrl.u32 %v663, 7
    %v665 = vsub.s32 5, %v664
    %v666 = vrot.slane %v535, %v665
    %v667 = vlaneseq
    %v668 = vshrl.u32 %v667, 7
    %v669 = vsub.s32 6, %v668
    %v670 = vrot.slane %v535, %v669
    %v671 = vlaneseq
    %v672 = vshrl.u32 %v671, 7
    %v673 = vsub.s32 7, %v672
    %v674 = vrot.slane %v535, %v673
    %v675 = vlaneseq
    %v676 = vshrl.u32 %v675, 7
    %v677 = vsub.s32 0, %v676
    %v678 = vrot.slane %v537, %v677
    %v712 = vmul.f32 %v540, %v550
    %v713 = vmul.f32 %v540, %v554
    %v714 = vmul.f32 %v540, %v558
    %v715 = vmul.f32 %v540, %v562
    %v716 = vmul.f32 %v540, %v566
    %v717 = vmul.f32 %v540, %v570
    %v718 = vmul.f32 %v540, %v574
    %v719 = vmul.f32 %v540, %v578
    %v720 = vmul.f32 %v540, %v582
    %v721 = vmul.f32 %v540, %v586
    %v722 = vmul.f32 %v540, %v590
    %v723 = vmul.f32 %v540, %v594
    %v724 = vmul.f32 %v540, %v598
    %v725 = vmul.f32 %v540, %v602
    %v726 = vmul.f32 %v540, %v606
    %v727 = vmul.f32 %v540, %v610
    %v728 = vmul.f32 %v540, %v614
    %v729 = vmul.f32 %v540, %v618
    %v730 = vmul.f32 %v540, %v622
    %v731 = vmul.f32 %v540, %v626
    %v732 = vmul.f32 %v540, %v630
    %v733 = vmul.f32 %v540, %v634
    %v734 = vmul.f32 %v540, %v638
    %v735 = vmul.f32 %v540, %v642
    %v736 = vmul.f32 %v540, %v646
    %v737 = vmul.f32 %v540, %v650
    %v738 = vmul.f32 %v540, %v654
    %v739 = vmul.f32 %v540, %v658
    %v740 = vmul.f32 %v540, %v662
    %v741 = vmul.f32 %v540, %v666
    %v742 = vmul.f32 %v540, %v670
    %v743 = vmul.f32 %v540, %v674
    %v744 = vmul.f32 %v540, %v678
    %v745 = vadd.f32 %v487, %v712
    %v746 = vadd.f32 %v488, %v713
    %v747 = vadd.f32 %v489, %v714
    %v748 = vadd.f32 %v490, %v715
    %v749 = vadd.f32 %v491, %v716
    %v750 = vadd.f32 %v492, %v717
    %v751 = vadd.f32 %v493, %v718
    %v752 = vadd.f32 %v494, %v719
    %v753 = vadd.f32 %v495, %v720
    %v754 = vadd.f32 %v496, %v721
    %v755 = vadd.f32 %v497, %v722
    %v756 = vadd.f32 %v498, %v723
    %v757 = vadd.f32 %v499, %v724
    %v758 = vadd.f32 %v500, %v725
    %v759 = vadd.f32 %v501, %v726
    %v760 = vadd.f32 %v502, %v727
    %v761 = vadd.f32 %v503, %v728
    %v762 = vadd.f32 %v504, %v729
    %v763 = vadd.f32 %v505, %v730
    %v764 = vadd.f32 %v506, %v731
    %v765 = vadd.f32 %v507, %v732
    %v766 = vadd.f32 %v508, %v733
    %v767 = vadd.f32 %v509, %v734
    %v768 = vadd.f32 %v510, %v735
    %v769 = vadd.f32 %v511, %v736
    %v770 = vadd.f32 %v512, %v737
    %v771 = vadd.f32 %v513, %v738
    %v772 = vadd.f32 %v514, %v739
    %v773 = vadd.f32 %v515, %v740
    %v774 = vadd.f32 %v516, %v741
    %v775 = vadd.f32 %v517, %v742
    %v776 = vadd.f32 %v518, %v743
    %v777 = vadd.f32 %v519, %v744
    %s778 = scalar_lea.vmem [#allocation2], 3
    %v779 = vld [vmem:[%s778] ss:$8 sm:$0xf]
    %v780 = vld [vmem:[%s778] ss:$8 sm:$0xf0]
    %v781 = vor.u32 %v779, %v780
    %s782 = scalar_lea.vmem [#allocation2], 67
    %v783 = vld [vmem:[%s782] ss:$8 sm:$0xf]
    %v784 = vld [vmem:[%s782] ss:$8 sm:$0xf0]
    %v785 = vor.u32 %v783, %v784
    %s786 = scalar_lea.vmem [#allocation2], 131
    %v787 = vld [vmem:[%s786] ss:$8 sm:$0xf]
    %v788 = vld [vmem:[%s786] ss:$8 sm:$0xf0]
    %v789 = vor.u32 %v787, %v788
    %s790 = scalar_lea.vmem [#allocation2], 195
    %v791 = vld [vmem:[%s790] ss:$8 sm:$0xf]
    %v792 = vld [vmem:[%s790] ss:$8 sm:$0xf0]
    %v793 = vor.u32 %v791, %v792
    %s794 = scalar_lea.vmem [#allocation2], 259
    %v795 = vld [vmem:[%s794] ss:$8 sm:$0x1]
    %796 = vset.pattern.permute.xlu0 3
    %797 = vperm.xlu0 %796, %v36
    %v798 = vpop.permute.xlu0 %797
    %v805 = vlaneseq
    %v806 = vshrl.u32 %v805, 7
    %v807 = vsub.s32 0, %v806
    %v808 = vrot.slane %v781, %v807
    %v809 = vlaneseq
    %v810 = vshrl.u32 %v809, 7
    %v811 = vsub.s32 1, %v810
    %v812 = vrot.slane %v781, %v811
    %v813 = vlaneseq
    %v814 = vshrl.u32 %v813, 7
    %v815 = vsub.s32 2, %v814
    %v816 = vrot.slane %v781, %v815
    %v817 = vlaneseq
    %v818 = vshrl.u32 %v817, 7
    %v819 = vsub.s32 3, %v818
    %v820 = vrot.slane %v781, %v819
    %v821 = vlaneseq
    %v822 = vshrl.u32 %v821, 7
    %v823 = vsub.s32 4, %v822
    %v824 = vrot.slane %v781, %v823
    %v825 = vlaneseq
    %v826 = vshrl.u32 %v825, 7
    %v827 = vsub.s32 5, %v826
    %v828 = vrot.slane %v781, %v827
    %v829 = vlaneseq
    %v830 = vshrl.u32 %v829, 7
    %v831 = vsub.s32 6, %v830
    %v832 = vrot.slane %v781, %v831
    %v833 = vlaneseq
    %v834 = vshrl.u32 %v833, 7
    %v835 = vsub.s32 7, %v834
    %v836 = vrot.slane %v781, %v835
    %v837 = vlaneseq
    %v838 = vshrl.u32 %v837, 7
    %v839 = vsub.s32 0, %v838
    %v840 = vrot.slane %v785, %v839
    %v841 = vlaneseq
    %v842 = vshrl.u32 %v841, 7
    %v843 = vsub.s32 1, %v842
    %v844 = vrot.slane %v785, %v843
    %v845 = vlaneseq
    %v846 = vshrl.u32 %v845, 7
    %v847 = vsub.s32 2, %v846
    %v848 = vrot.slane %v785, %v847
    %v849 = vlaneseq
    %v850 = vshrl.u32 %v849, 7
    %v851 = vsub.s32 3, %v850
    %v852 = vrot.slane %v785, %v851
    %v853 = vlaneseq
    %v854 = vshrl.u32 %v853, 7
    %v855 = vsub.s32 4, %v854
    %v856 = vrot.slane %v785, %v855
    %v857 = vlaneseq
    %v858 = vshrl.u32 %v857, 7
    %v859 = vsub.s32 5, %v858
    %v860 = vrot.slane %v785, %v859
    %v861 = vlaneseq
    %v862 = vshrl.u32 %v861, 7
    %v863 = vsub.s32 6, %v862
    %v864 = vrot.slane %v785, %v863
    %v865 = vlaneseq
    %v866 = vshrl.u32 %v865, 7
    %v867 = vsub.s32 7, %v866
    %v868 = vrot.slane %v785, %v867
    %v869 = vlaneseq
    %v870 = vshrl.u32 %v869, 7
    %v871 = vsub.s32 0, %v870
    %v872 = vrot.slane %v789, %v871
    %v873 = vlaneseq
    %v874 = vshrl.u32 %v873, 7
    %v875 = vsub.s32 1, %v874
    %v876 = vrot.slane %v789, %v875
    %v877 = vlaneseq
    %v878 = vshrl.u32 %v877, 7
    %v879 = vsub.s32 2, %v878
    %v880 = vrot.slane %v789, %v879
    %v881 = vlaneseq
    %v882 = vshrl.u32 %v881, 7
    %v883 = vsub.s32 3, %v882
    %v884 = vrot.slane %v789, %v883
    %v885 = vlaneseq
    %v886 = vshrl.u32 %v885, 7
    %v887 = vsub.s32 4, %v886
    %v888 = vrot.slane %v789, %v887
    %v889 = vlaneseq
    %v890 = vshrl.u32 %v889, 7
    %v891 = vsub.s32 5, %v890
    %v892 = vrot.slane %v789, %v891
    %v893 = vlaneseq
    %v894 = vshrl.u32 %v893, 7
    %v895 = vsub.s32 6, %v894
    %v896 = vrot.slane %v789, %v895
    %v897 = vlaneseq
    %v898 = vshrl.u32 %v897, 7
    %v899 = vsub.s32 7, %v898
    %v900 = vrot.slane %v789, %v899
    %v901 = vlaneseq
    %v902 = vshrl.u32 %v901, 7
    %v903 = vsub.s32 0, %v902
    %v904 = vrot.slane %v793, %v903
    %v905 = vlaneseq
    %v906 = vshrl.u32 %v905, 7
    %v907 = vsub.s32 1, %v906
    %v908 = vrot.slane %v793, %v907
    %v909 = vlaneseq
    %v910 = vshrl.u32 %v909, 7
    %v911 = vsub.s32 2, %v910
    %v912 = vrot.slane %v793, %v911
    %v913 = vlaneseq
    %v914 = vshrl.u32 %v913, 7
    %v915 = vsub.s32 3, %v914
    %v916 = vrot.slane %v793, %v915
    %v917 = vlaneseq
    %v918 = vshrl.u32 %v917, 7
    %v919 = vsub.s32 4, %v918
    %v920 = vrot.slane %v793, %v919
    %v921 = vlaneseq
    %v922 = vshrl.u32 %v921, 7
    %v923 = vsub.s32 5, %v922
    %v924 = vrot.slane %v793, %v923
    %v925 = vlaneseq
    %v926 = vshrl.u32 %v925, 7
    %v927 = vsub.s32 6, %v926
    %v928 = vrot.slane %v793, %v927
    %v929 = vlaneseq
    %v930 = vshrl.u32 %v929, 7
    %v931 = vsub.s32 7, %v930
    %v932 = vrot.slane %v793, %v931
    %v933 = vlaneseq
    %v934 = vshrl.u32 %v933, 7
    %v935 = vsub.s32 0, %v934
    %v936 = vrot.slane %v795, %v935
    %v970 = vmul.f32 %v798, %v808
    %v971 = vmul.f32 %v798, %v812
    %v972 = vmul.f32 %v798, %v816
    %v973 = vmul.f32 %v798, %v820
    %v974 = vmul.f32 %v798, %v824
    %v975 = vmul.f32 %v798, %v828
    %v976 = vmul.f32 %v798, %v832
    %v977 = vmul.f32 %v798, %v836
    %v978 = vmul.f32 %v798, %v840
    %v979 = vmul.f32 %v798, %v844
    %v980 = vmul.f32 %v798, %v848
    %v981 = vmul.f32 %v798, %v852
    %v982 = vmul.f32 %v798, %v856
    %v983 = vmul.f32 %v798, %v860
    %v984 = vmul.f32 %v798, %v864
    %v985 = vmul.f32 %v798, %v868
    %v986 = vmul.f32 %v798, %v872
    %v987 = vmul.f32 %v798, %v876
    %v988 = vmul.f32 %v798, %v880
    %v989 = vmul.f32 %v798, %v884
    %v990 = vmul.f32 %v798, %v888
    %v991 = vmul.f32 %v798, %v892
    %v992 = vmul.f32 %v798, %v896
    %v993 = vmul.f32 %v798, %v900
    %v994 = vmul.f32 %v798, %v904
    %v995 = vmul.f32 %v798, %v908
    %v996 = vmul.f32 %v798, %v912
    %v997 = vmul.f32 %v798, %v916
    %v998 = vmul.f32 %v798, %v920
    %v999 = vmul.f32 %v798, %v924
    %v1000 = vmul.f32 %v798, %v928
    %v1001 = vmul.f32 %v798, %v932
    %v1002 = vmul.f32 %v798, %v936
    %v1003 = vadd.f32 %v745, %v970
    %v1004 = vadd.f32 %v746, %v971
    %v1005 = vadd.f32 %v747, %v972
    %v1006 = vadd.f32 %v748, %v973
    %v1007 = vadd.f32 %v749, %v974
    %v1008 = vadd.f32 %v750, %v975
    %v1009 = vadd.f32 %v751, %v976
    %v1010 = vadd.f32 %v752, %v977
    %v1011 = vadd.f32 %v753, %v978
    %v1012 = vadd.f32 %v754, %v979
    %v1013 = vadd.f32 %v755, %v980
    %v1014 = vadd.f32 %v756, %v981
    %v1015 = vadd.f32 %v757, %v982
    %v1016 = vadd.f32 %v758, %v983
    %v1017 = vadd.f32 %v759, %v984
    %v1018 = vadd.f32 %v760, %v985
    %v1019 = vadd.f32 %v761, %v986
    %v1020 = vadd.f32 %v762, %v987
    %v1021 = vadd.f32 %v763, %v988
    %v1022 = vadd.f32 %v764, %v989
    %v1023 = vadd.f32 %v765, %v990
    %v1024 = vadd.f32 %v766, %v991
    %v1025 = vadd.f32 %v767, %v992
    %v1026 = vadd.f32 %v768, %v993
    %v1027 = vadd.f32 %v769, %v994
    %v1028 = vadd.f32 %v770, %v995
    %v1029 = vadd.f32 %v771, %v996
    %v1030 = vadd.f32 %v772, %v997
    %v1031 = vadd.f32 %v773, %v998
    %v1032 = vadd.f32 %v774, %v999
    %v1033 = vadd.f32 %v775, %v1000
    %v1034 = vadd.f32 %v776, %v1001
    %v1035 = vadd.f32 %v777, %v1002
    %s1036 = scalar_lea.vmem [#allocation2], 4
    %v1037 = vld [vmem:[%s1036] ss:$8 sm:$0xf]
    %v1038 = vld [vmem:[%s1036] ss:$8 sm:$0xf0]
    %v1039 = vor.u32 %v1037, %v1038
    %s1040 = scalar_lea.vmem [#allocation2], 68
    %v1041 = vld [vmem:[%s1040] ss:$8 sm:$0xf]
    %v1042 = vld [vmem:[%s1040] ss:$8 sm:$0xf0]
    %v1043 = vor.u32 %v1041, %v1042
    %s1044 = scalar_lea.vmem [#allocation2], 132
    %v1045 = vld [vmem:[%s1044] ss:$8 sm:$0xf]
    %v1046 = vld [vmem:[%s1044] ss:$8 sm:$0xf0]
    %v1047 = vor.u32 %v1045, %v1046
    %s1048 = scalar_lea.vmem [#allocation2], 196
    %v1049 = vld [vmem:[%s1048] ss:$8 sm:$0xf]
    %v1050 = vld [vmem:[%s1048] ss:$8 sm:$0xf0]
    %v1051 = vor.u32 %v1049, %v1050
    %s1052 = scalar_lea.vmem [#allocation2], 260
    %v1053 = vld [vmem:[%s1052] ss:$8 sm:$0x1]
    %1054 = vset.pattern.permute.xlu0 4
    %1055 = vperm.xlu0 %1054, %v36
    %v1056 = vpop.permute.xlu0 %1055
    %v1063 = vlaneseq
    %v1064 = vshrl.u32 %v1063, 7
    %v1065 = vsub.s32 0, %v1064
    %v1066 = vrot.slane %v1039, %v1065
    %v1067 = vlaneseq
    %v1068 = vshrl.u32 %v1067, 7
    %v1069 = vsub.s32 1, %v1068
    %v1070 = vrot.slane %v1039, %v1069
    %v1071 = vlaneseq
    %v1072 = vshrl.u32 %v1071, 7
    %v1073 = vsub.s32 2, %v1072
    %v1074 = vrot.slane %v1039, %v1073
    %v1075 = vlaneseq
    %v1076 = vshrl.u32 %v1075, 7
    %v1077 = vsub.s32 3, %v1076
    %v1078 = vrot.slane %v1039, %v1077
    %v1079 = vlaneseq
    %v1080 = vshrl.u32 %v1079, 7
    %v1081 = vsub.s32 4, %v1080
    %v1082 = vrot.slane %v1039, %v1081
    %v1083 = vlaneseq
    %v1084 = vshrl.u32 %v1083, 7
    %v1085 = vsub.s32 5, %v1084
    %v1086 = vrot.slane %v1039, %v1085
    %v1087 = vlaneseq
    %v1088 = vshrl.u32 %v1087, 7
    %v1089 = vsub.s32 6, %v1088
    %v1090 = vrot.slane %v1039, %v1089
    %v1091 = vlaneseq
    %v1092 = vshrl.u32 %v1091, 7
    %v1093 = vsub.s32 7, %v1092
    %v1094 = vrot.slane %v1039, %v1093
    %v1095 = vlaneseq
    %v1096 = vshrl.u32 %v1095, 7
    %v1097 = vsub.s32 0, %v1096
    %v1098 = vrot.slane %v1043, %v1097
    %v1099 = vlaneseq
    %v1100 = vshrl.u32 %v1099, 7
    %v1101 = vsub.s32 1, %v1100
    %v1102 = vrot.slane %v1043, %v1101
    %v1103 = vlaneseq
    %v1104 = vshrl.u32 %v1103, 7
    %v1105 = vsub.s32 2, %v1104
    %v1106 = vrot.slane %v1043, %v1105
    %v1107 = vlaneseq
    %v1108 = vshrl.u32 %v1107, 7
    %v1109 = vsub.s32 3, %v1108
    %v1110 = vrot.slane %v1043, %v1109
    %v1111 = vlaneseq
    %v1112 = vshrl.u32 %v1111, 7
    %v1113 = vsub.s32 4, %v1112
    %v1114 = vrot.slane %v1043, %v1113
    %v1115 = vlaneseq
    %v1116 = vshrl.u32 %v1115, 7
    %v1117 = vsub.s32 5, %v1116
    %v1118 = vrot.slane %v1043, %v1117
    %v1119 = vlaneseq
    %v1120 = vshrl.u32 %v1119, 7
    %v1121 = vsub.s32 6, %v1120
    %v1122 = vrot.slane %v1043, %v1121
    %v1123 = vlaneseq
    %v1124 = vshrl.u32 %v1123, 7
    %v1125 = vsub.s32 7, %v1124
    %v1126 = vrot.slane %v1043, %v1125
    %v1127 = vlaneseq
    %v1128 = vshrl.u32 %v1127, 7
    %v1129 = vsub.s32 0, %v1128
    %v1130 = vrot.slane %v1047, %v1129
    %v1131 = vlaneseq
    %v1132 = vshrl.u32 %v1131, 7
    %v1133 = vsub.s32 1, %v1132
    %v1134 = vrot.slane %v1047, %v1133
    %v1135 = vlaneseq
    %v1136 = vshrl.u32 %v1135, 7
    %v1137 = vsub.s32 2, %v1136
    %v1138 = vrot.slane %v1047, %v1137
    %v1139 = vlaneseq
    %v1140 = vshrl.u32 %v1139, 7
    %v1141 = vsub.s32 3, %v1140
    %v1142 = vrot.slane %v1047, %v1141
    %v1143 = vlaneseq
    %v1144 = vshrl.u32 %v1143, 7
    %v1145 = vsub.s32 4, %v1144
    %v1146 = vrot.slane %v1047, %v1145
    %v1147 = vlaneseq
    %v1148 = vshrl.u32 %v1147, 7
    %v1149 = vsub.s32 5, %v1148
    %v1150 = vrot.slane %v1047, %v1149
    %v1151 = vlaneseq
    %v1152 = vshrl.u32 %v1151, 7
    %v1153 = vsub.s32 6, %v1152
    %v1154 = vrot.slane %v1047, %v1153
    %v1155 = vlaneseq
    %v1156 = vshrl.u32 %v1155, 7
    %v1157 = vsub.s32 7, %v1156
    %v1158 = vrot.slane %v1047, %v1157
    %v1159 = vlaneseq
    %v1160 = vshrl.u32 %v1159, 7
    %v1161 = vsub.s32 0, %v1160
    %v1162 = vrot.slane %v1051, %v1161
    %v1163 = vlaneseq
    %v1164 = vshrl.u32 %v1163, 7
    %v1165 = vsub.s32 1, %v1164
    %v1166 = vrot.slane %v1051, %v1165
    %v1167 = vlaneseq
    %v1168 = vshrl.u32 %v1167, 7
    %v1169 = vsub.s32 2, %v1168
    %v1170 = vrot.slane %v1051, %v1169
    %v1171 = vlaneseq
    %v1172 = vshrl.u32 %v1171, 7
    %v1173 = vsub.s32 3, %v1172
    %v1174 = vrot.slane %v1051, %v1173
    %v1175 = vlaneseq
    %v1176 = vshrl.u32 %v1175, 7
    %v1177 = vsub.s32 4, %v1176
    %v1178 = vrot.slane %v1051, %v1177
    %v1179 = vlaneseq
    %v1180 = vshrl.u32 %v1179, 7
    %v1181 = vsub.s32 5, %v1180
    %v1182 = vrot.slane %v1051, %v1181
    %v1183 = vlaneseq
    %v1184 = vshrl.u32 %v1183, 7
    %v1185 = vsub.s32 6, %v1184
    %v1186 = vrot.slane %v1051, %v1185
    %v1187 = vlaneseq
    %v1188 = vshrl.u32 %v1187, 7
    %v1189 = vsub.s32 7, %v1188
    %v1190 = vrot.slane %v1051, %v1189
    %v1191 = vlaneseq
    %v1192 = vshrl.u32 %v1191, 7
    %v1193 = vsub.s32 0, %v1192
    %v1194 = vrot.slane %v1053, %v1193
    %v1228 = vmul.f32 %v1056, %v1066
    %v1229 = vmul.f32 %v1056, %v1070
    %v1230 = vmul.f32 %v1056, %v1074
    %v1231 = vmul.f32 %v1056, %v1078
    %v1232 = vmul.f32 %v1056, %v1082
    %v1233 = vmul.f32 %v1056, %v1086
    %v1234 = vmul.f32 %v1056, %v1090
    %v1235 = vmul.f32 %v1056, %v1094
    %v1236 = vmul.f32 %v1056, %v1098
    %v1237 = vmul.f32 %v1056, %v1102
    %v1238 = vmul.f32 %v1056, %v1106
    %v1239 = vmul.f32 %v1056, %v1110
    %v1240 = vmul.f32 %v1056, %v1114
    %v1241 = vmul.f32 %v1056, %v1118
    %v1242 = vmul.f32 %v1056, %v1122
    %v1243 = vmul.f32 %v1056, %v1126
    %v1244 = vmul.f32 %v1056, %v1130
    %v1245 = vmul.f32 %v1056, %v1134
    %v1246 = vmul.f32 %v1056, %v1138
    %v1247 = vmul.f32 %v1056, %v1142
    %v1248 = vmul.f32 %v1056, %v1146
    %v1249 = vmul.f32 %v1056, %v1150
    %v1250 = vmul.f32 %v1056, %v1154
    %v1251 = vmul.f32 %v1056, %v1158
    %v1252 = vmul.f32 %v1056, %v1162
    %v1253 = vmul.f32 %v1056, %v1166
    %v1254 = vmul.f32 %v1056, %v1170
    %v1255 = vmul.f32 %v1056, %v1174
    %v1256 = vmul.f32 %v1056, %v1178
    %v1257 = vmul.f32 %v1056, %v1182
    %v1258 = vmul.f32 %v1056, %v1186
    %v1259 = vmul.f32 %v1056, %v1190
    %v1260 = vmul.f32 %v1056, %v1194
    %v1261 = vadd.f32 %v1003, %v1228
    %v1262 = vadd.f32 %v1004, %v1229
    %v1263 = vadd.f32 %v1005, %v1230
    %v1264 = vadd.f32 %v1006, %v1231
    %v1265 = vadd.f32 %v1007, %v1232
    %v1266 = vadd.f32 %v1008, %v1233
    %v1267 = vadd.f32 %v1009, %v1234
    %v1268 = vadd.f32 %v1010, %v1235
    %v1269 = vadd.f32 %v1011, %v1236
    %v1270 = vadd.f32 %v1012, %v1237
    %v1271 = vadd.f32 %v1013, %v1238
    %v1272 = vadd.f32 %v1014, %v1239
    %v1273 = vadd.f32 %v1015, %v1240
    %v1274 = vadd.f32 %v1016, %v1241
    %v1275 = vadd.f32 %v1017, %v1242
    %v1276 = vadd.f32 %v1018, %v1243
    %v1277 = vadd.f32 %v1019, %v1244
    %v1278 = vadd.f32 %v1020, %v1245
    %v1279 = vadd.f32 %v1021, %v1246
    %v1280 = vadd.f32 %v1022, %v1247
    %v1281 = vadd.f32 %v1023, %v1248
    %v1282 = vadd.f32 %v1024, %v1249
    %v1283 = vadd.f32 %v1025, %v1250
    %v1284 = vadd.f32 %v1026, %v1251
    %v1285 = vadd.f32 %v1027, %v1252
    %v1286 = vadd.f32 %v1028, %v1253
    %v1287 = vadd.f32 %v1029, %v1254
    %v1288 = vadd.f32 %v1030, %v1255
    %v1289 = vadd.f32 %v1031, %v1256
    %v1290 = vadd.f32 %v1032, %v1257
    %v1291 = vadd.f32 %v1033, %v1258
    %v1292 = vadd.f32 %v1034, %v1259
    %v1293 = vadd.f32 %v1035, %v1260
    %s1294 = scalar_lea.vmem [#allocation2], 5
    %v1295 = vld [vmem:[%s1294] ss:$8 sm:$0xf]
    %v1296 = vld [vmem:[%s1294] ss:$8 sm:$0xf0]
    %v1297 = vor.u32 %v1295, %v1296
    %s1298 = scalar_lea.vmem [#allocation2], 69
    %v1299 = vld [vmem:[%s1298] ss:$8 sm:$0xf]
    %v1300 = vld [vmem:[%s1298] ss:$8 sm:$0xf0]
    %v1301 = vor.u32 %v1299, %v1300
    %s1302 = scalar_lea.vmem [#allocation2], 133
    %v1303 = vld [vmem:[%s1302] ss:$8 sm:$0xf]
    %v1304 = vld [vmem:[%s1302] ss:$8 sm:$0xf0]
    %v1305 = vor.u32 %v1303, %v1304
    %s1306 = scalar_lea.vmem [#allocation2], 197
    %v1307 = vld [vmem:[%s1306] ss:$8 sm:$0xf]
    %v1308 = vld [vmem:[%s1306] ss:$8 sm:$0xf0]
    %v1309 = vor.u32 %v1307, %v1308
    %s1310 = scalar_lea.vmem [#allocation2], 261
    %v1311 = vld [vmem:[%s1310] ss:$8 sm:$0x1]
    %1312 = vset.pattern.permute.xlu0 5
    %1313 = vperm.xlu0 %1312, %v36
    %v1314 = vpop.permute.xlu0 %1313
    %v1321 = vlaneseq
    %v1322 = vshrl.u32 %v1321, 7
    %v1323 = vsub.s32 0, %v1322
    %v1324 = vrot.slane %v1297, %v1323
    %v1325 = vlaneseq
    %v1326 = vshrl.u32 %v1325, 7
    %v1327 = vsub.s32 1, %v1326
    %v1328 = vrot.slane %v1297, %v1327
    %v1329 = vlaneseq
    %v1330 = vshrl.u32 %v1329, 7
    %v1331 = vsub.s32 2, %v1330
    %v1332 = vrot.slane %v1297, %v1331
    %v1333 = vlaneseq
    %v1334 = vshrl.u32 %v1333, 7
    %v1335 = vsub.s32 3, %v1334
    %v1336 = vrot.slane %v1297, %v1335
    %v1337 = vlaneseq
    %v1338 = vshrl.u32 %v1337, 7
    %v1339 = vsub.s32 4, %v1338
    %v1340 = vrot.slane %v1297, %v1339
    %v1341 = vlaneseq
    %v1342 = vshrl.u32 %v1341, 7
    %v1343 = vsub.s32 5, %v1342
    %v1344 = vrot.slane %v1297, %v1343
    %v1345 = vlaneseq
    %v1346 = vshrl.u32 %v1345, 7
    %v1347 = vsub.s32 6, %v1346
    %v1348 = vrot.slane %v1297, %v1347
    %v1349 = vlaneseq
    %v1350 = vshrl.u32 %v1349, 7
    %v1351 = vsub.s32 7, %v1350
    %v1352 = vrot.slane %v1297, %v1351
    %v1353 = vlaneseq
    %v1354 = vshrl.u32 %v1353, 7
    %v1355 = vsub.s32 0, %v1354
    %v1356 = vrot.slane %v1301, %v1355
    %v1357 = vlaneseq
    %v1358 = vshrl.u32 %v1357, 7
    %v1359 = vsub.s32 1, %v1358
    %v1360 = vrot.slane %v1301, %v1359
    %v1361 = vlaneseq
    %v1362 = vshrl.u32 %v1361, 7
    %v1363 = vsub.s32 2, %v1362
    %v1364 = vrot.slane %v1301, %v1363
    %v1365 = vlaneseq
    %v1366 = vshrl.u32 %v1365, 7
    %v1367 = vsub.s32 3, %v1366
    %v1368 = vrot.slane %v1301, %v1367
    %v1369 = vlaneseq
    %v1370 = vshrl.u32 %v1369, 7
    %v1371 = vsub.s32 4, %v1370
    %v1372 = vrot.slane %v1301, %v1371
    %v1373 = vlaneseq
    %v1374 = vshrl.u32 %v1373, 7
    %v1375 = vsub.s32 5, %v1374
    %v1376 = vrot.slane %v1301, %v1375
    %v1377 = vlaneseq
    %v1378 = vshrl.u32 %v1377, 7
    %v1379 = vsub.s32 6, %v1378
    %v1380 = vrot.slane %v1301, %v1379
    %v1381 = vlaneseq
    %v1382 = vshrl.u32 %v1381, 7
    %v1383 = vsub.s32 7, %v1382
    %v1384 = vrot.slane %v1301, %v1383
    %v1385 = vlaneseq
    %v1386 = vshrl.u32 %v1385, 7
    %v1387 = vsub.s32 0, %v1386
    %v1388 = vrot.slane %v1305, %v1387
    %v1389 = vlaneseq
    %v1390 = vshrl.u32 %v1389, 7
    %v1391 = vsub.s32 1, %v1390
    %v1392 = vrot.slane %v1305, %v1391
    %v1393 = vlaneseq
    %v1394 = vshrl.u32 %v1393, 7
    %v1395 = vsub.s32 2, %v1394
    %v1396 = vrot.slane %v1305, %v1395
    %v1397 = vlaneseq
    %v1398 = vshrl.u32 %v1397, 7
    %v1399 = vsub.s32 3, %v1398
    %v1400 = vrot.slane %v1305, %v1399
    %v1401 = vlaneseq
    %v1402 = vshrl.u32 %v1401, 7
    %v1403 = vsub.s32 4, %v1402
    %v1404 = vrot.slane %v1305, %v1403
    %v1405 = vlaneseq
    %v1406 = vshrl.u32 %v1405, 7
    %v1407 = vsub.s32 5, %v1406
    %v1408 = vrot.slane %v1305, %v1407
    %v1409 = vlaneseq
    %v1410 = vshrl.u32 %v1409, 7
    %v1411 = vsub.s32 6, %v1410
    %v1412 = vrot.slane %v1305, %v1411
    %v1413 = vlaneseq
    %v1414 = vshrl.u32 %v1413, 7
    %v1415 = vsub.s32 7, %v1414
    %v1416 = vrot.slane %v1305, %v1415
    %v1417 = vlaneseq
    %v1418 = vshrl.u32 %v1417, 7
    %v1419 = vsub.s32 0, %v1418
    %v1420 = vrot.slane %v1309, %v1419
    %v1421 = vlaneseq
    %v1422 = vshrl.u32 %v1421, 7
    %v1423 = vsub.s32 1, %v1422
    %v1424 = vrot.slane %v1309, %v1423
    %v1425 = vlaneseq
    %v1426 = vshrl.u32 %v1425, 7
    %v1427 = vsub.s32 2, %v1426
    %v1428 = vrot.slane %v1309, %v1427
    %v1429 = vlaneseq
    %v1430 = vshrl.u32 %v1429, 7
    %v1431 = vsub.s32 3, %v1430
    %v1432 = vrot.slane %v1309, %v1431
    %v1433 = vlaneseq
    %v1434 = vshrl.u32 %v1433, 7
    %v1435 = vsub.s32 4, %v1434
    %v1436 = vrot.slane %v1309, %v1435
    %v1437 = vlaneseq
    %v1438 = vshrl.u32 %v1437, 7
    %v1439 = vsub.s32 5, %v1438
    %v1440 = vrot.slane %v1309, %v1439
    %v1441 = vlaneseq
    %v1442 = vshrl.u32 %v1441, 7
    %v1443 = vsub.s32 6, %v1442
    %v1444 = vrot.slane %v1309, %v1443
    %v1445 = vlaneseq
    %v1446 = vshrl.u32 %v1445, 7
    %v1447 = vsub.s32 7, %v1446
    %v1448 = vrot.slane %v1309, %v1447
    %v1449 = vlaneseq
    %v1450 = vshrl.u32 %v1449, 7
    %v1451 = vsub.s32 0, %v1450
    %v1452 = vrot.slane %v1311, %v1451
    %v1486 = vmul.f32 %v1314, %v1324
    %v1487 = vmul.f32 %v1314, %v1328
    %v1488 = vmul.f32 %v1314, %v1332
    %v1489 = vmul.f32 %v1314, %v1336
    %v1490 = vmul.f32 %v1314, %v1340
    %v1491 = vmul.f32 %v1314, %v1344
    %v1492 = vmul.f32 %v1314, %v1348
    %v1493 = vmul.f32 %v1314, %v1352
    %v1494 = vmul.f32 %v1314, %v1356
    %v1495 = vmul.f32 %v1314, %v1360
    %v1496 = vmul.f32 %v1314, %v1364
    %v1497 = vmul.f32 %v1314, %v1368
    %v1498 = vmul.f32 %v1314, %v1372
    %v1499 = vmul.f32 %v1314, %v1376
    %v1500 = vmul.f32 %v1314, %v1380
    %v1501 = vmul.f32 %v1314, %v1384
    %v1502 = vmul.f32 %v1314, %v1388
    %v1503 = vmul.f32 %v1314, %v1392
    %v1504 = vmul.f32 %v1314, %v1396
    %v1505 = vmul.f32 %v1314, %v1400
    %v1506 = vmul.f32 %v1314, %v1404
    %v1507 = vmul.f32 %v1314, %v1408
    %v1508 = vmul.f32 %v1314, %v1412
    %v1509 = vmul.f32 %v1314, %v1416
    %v1510 = vmul.f32 %v1314, %v1420
    %v1511 = vmul.f32 %v1314, %v1424
    %v1512 = vmul.f32 %v1314, %v1428
    %v1513 = vmul.f32 %v1314, %v1432
    %v1514 = vmul.f32 %v1314, %v1436
    %v1515 = vmul.f32 %v1314, %v1440
    %v1516 = vmul.f32 %v1314, %v1444
    %v1517 = vmul.f32 %v1314, %v1448
    %v1518 = vmul.f32 %v1314, %v1452
    %v1519 = vadd.f32 %v1261, %v1486
    %v1520 = vadd.f32 %v1262, %v1487
    %v1521 = vadd.f32 %v1263, %v1488
    %v1522 = vadd.f32 %v1264, %v1489
    %v1523 = vadd.f32 %v1265, %v1490
    %v1524 = vadd.f32 %v1266, %v1491
    %v1525 = vadd.f32 %v1267, %v1492
    %v1526 = vadd.f32 %v1268, %v1493
    %v1527 = vadd.f32 %v1269, %v1494
    %v1528 = vadd.f32 %v1270, %v1495
    %v1529 = vadd.f32 %v1271, %v1496
    %v1530 = vadd.f32 %v1272, %v1497
    %v1531 = vadd.f32 %v1273, %v1498
    %v1532 = vadd.f32 %v1274, %v1499
    %v1533 = vadd.f32 %v1275, %v1500
    %v1534 = vadd.f32 %v1276, %v1501
    %v1535 = vadd.f32 %v1277, %v1502
    %v1536 = vadd.f32 %v1278, %v1503
    %v1537 = vadd.f32 %v1279, %v1504
    %v1538 = vadd.f32 %v1280, %v1505
    %v1539 = vadd.f32 %v1281, %v1506
    %v1540 = vadd.f32 %v1282, %v1507
    %v1541 = vadd.f32 %v1283, %v1508
    %v1542 = vadd.f32 %v1284, %v1509
    %v1543 = vadd.f32 %v1285, %v1510
    %v1544 = vadd.f32 %v1286, %v1511
    %v1545 = vadd.f32 %v1287, %v1512
    %v1546 = vadd.f32 %v1288, %v1513
    %v1547 = vadd.f32 %v1289, %v1514
    %v1548 = vadd.f32 %v1290, %v1515
    %v1549 = vadd.f32 %v1291, %v1516
    %v1550 = vadd.f32 %v1292, %v1517
    %v1551 = vadd.f32 %v1293, %v1518
    %1552 = vset.pattern.permute.xlu0 6
    %1553 = vperm.xlu0 %1552, %v36
    %v1554 = vpop.permute.xlu0 %1553
    %v1556 = vadd.f32 %v1519, %v1554
    %v1557 = vadd.f32 %v1520, %v1554
    %v1558 = vadd.f32 %v1521, %v1554
    %v1559 = vadd.f32 %v1522, %v1554
    %v1560 = vadd.f32 %v1523, %v1554
    %v1561 = vadd.f32 %v1524, %v1554
    %v1562 = vadd.f32 %v1525, %v1554
    %v1563 = vadd.f32 %v1526, %v1554
    %v1564 = vadd.f32 %v1527, %v1554
    %v1565 = vadd.f32 %v1528, %v1554
    %v1566 = vadd.f32 %v1529, %v1554
    %v1567 = vadd.f32 %v1530, %v1554
    %v1568 = vadd.f32 %v1531, %v1554
    %v1569 = vadd.f32 %v1532, %v1554
    %v1570 = vadd.f32 %v1533, %v1554
    %v1571 = vadd.f32 %v1534, %v1554
    %v1572 = vadd.f32 %v1535, %v1554
    %v1573 = vadd.f32 %v1536, %v1554
    %v1574 = vadd.f32 %v1537, %v1554
    %v1575 = vadd.f32 %v1538, %v1554
    %v1576 = vadd.f32 %v1539, %v1554
    %v1577 = vadd.f32 %v1540, %v1554
    %v1578 = vadd.f32 %v1541, %v1554
    %v1579 = vadd.f32 %v1542, %v1554
    %v1580 = vadd.f32 %v1543, %v1554
    %v1581 = vadd.f32 %v1544, %v1554
    %v1582 = vadd.f32 %v1545, %v1554
    %v1583 = vadd.f32 %v1546, %v1554
    %v1584 = vadd.f32 %v1547, %v1554
    %v1585 = vadd.f32 %v1548, %v1554
    %v1586 = vadd.f32 %v1549, %v1554
    %v1587 = vadd.f32 %v1550, %v1554
    %v1588 = vadd.f32 %v1551, %v1554
    %v1589 = vadd.f32 %v1556, %v1557
    %v1590 = vadd.f32 %v1589, %v1558
    %v1591 = vadd.f32 %v1590, %v1559
    %v1592 = vadd.f32 %v1591, %v1560
    %v1593 = vadd.f32 %v1592, %v1561
    %v1594 = vadd.f32 %v1593, %v1562
    %v1595 = vadd.f32 %v1594, %v1563
    %v1596 = vadd.f32 %v1595, %v1564
    %v1597 = vadd.f32 %v1596, %v1565
    %v1598 = vadd.f32 %v1597, %v1566
    %v1599 = vadd.f32 %v1598, %v1567
    %v1600 = vadd.f32 %v1599, %v1568
    %v1601 = vadd.f32 %v1600, %v1569
    %v1602 = vadd.f32 %v1601, %v1570
    %v1603 = vadd.f32 %v1602, %v1571
    %v1604 = vadd.f32 %v1603, %v1572
    %v1605 = vadd.f32 %v1604, %v1573
    %v1606 = vadd.f32 %v1605, %v1574
    %v1607 = vadd.f32 %v1606, %v1575
    %v1608 = vadd.f32 %v1607, %v1576
    %v1609 = vadd.f32 %v1608, %v1577
    %v1610 = vadd.f32 %v1609, %v1578
    %v1611 = vadd.f32 %v1610, %v1579
    %v1612 = vadd.f32 %v1611, %v1580
    %v1613 = vadd.f32 %v1612, %v1581
    %v1614 = vadd.f32 %v1613, %v1582
    %v1615 = vadd.f32 %v1614, %v1583
    %v1616 = vadd.f32 %v1615, %v1584
    %v1617 = vadd.f32 %v1616, %v1585
    %v1618 = vadd.f32 %v1617, %v1586
    %v1619 = vadd.f32 %v1618, %v1587
    %v1620 = vadd.f32 %v1619, %v1588
    %1621 = vadd.xlane.f32.xlu0 %v1620
    %v1622 = vpop.xlane.xlu0 %1621
    %v1623 = vmul.f32 %v36, 132.0
    %v1624 = vadd.f32 %v1622, %v1623
    %v1625 = vmul.f32 %v1556, %v1556
    %v1626 = vmul.f32 %v1557, %v1557
    %v1627 = vmul.f32 %v1558, %v1558
    %v1628 = vmul.f32 %v1559, %v1559
    %v1629 = vmul.f32 %v1560, %v1560
    %v1630 = vmul.f32 %v1561, %v1561
    %v1631 = vmul.f32 %v1562, %v1562
    %v1632 = vmul.f32 %v1563, %v1563
    %v1633 = vmul.f32 %v1564, %v1564
    %v1634 = vmul.f32 %v1565, %v1565
    %v1635 = vmul.f32 %v1566, %v1566
    %v1636 = vmul.f32 %v1567, %v1567
    %v1637 = vmul.f32 %v1568, %v1568
    %v1638 = vmul.f32 %v1569, %v1569
    %v1639 = vmul.f32 %v1570, %v1570
    %v1640 = vmul.f32 %v1571, %v1571
    %v1641 = vmul.f32 %v1572, %v1572
    %v1642 = vmul.f32 %v1573, %v1573
    %v1643 = vmul.f32 %v1574, %v1574
    %v1644 = vmul.f32 %v1575, %v1575
    %v1645 = vmul.f32 %v1576, %v1576
    %v1646 = vmul.f32 %v1577, %v1577
    %v1647 = vmul.f32 %v1578, %v1578
    %v1648 = vmul.f32 %v1579, %v1579
    %v1649 = vmul.f32 %v1580, %v1580
    %v1650 = vmul.f32 %v1581, %v1581
    %v1651 = vmul.f32 %v1582, %v1582
    %v1652 = vmul.f32 %v1583, %v1583
    %v1653 = vmul.f32 %v1584, %v1584
    %v1654 = vmul.f32 %v1585, %v1585
    %v1655 = vmul.f32 %v1586, %v1586
    %v1656 = vmul.f32 %v1587, %v1587
    %v1657 = vmul.f32 %v1588, %v1588
    %v1658 = vadd.f32 %v1625, %v1626
    %v1659 = vadd.f32 %v1658, %v1627
    %v1660 = vadd.f32 %v1659, %v1628
    %v1661 = vadd.f32 %v1660, %v1629
    %v1662 = vadd.f32 %v1661, %v1630
    %v1663 = vadd.f32 %v1662, %v1631
    %v1664 = vadd.f32 %v1663, %v1632
    %v1665 = vadd.f32 %v1664, %v1633
    %v1666 = vadd.f32 %v1665, %v1634
    %v1667 = vadd.f32 %v1666, %v1635
    %v1668 = vadd.f32 %v1667, %v1636
    %v1669 = vadd.f32 %v1668, %v1637
    %v1670 = vadd.f32 %v1669, %v1638
    %v1671 = vadd.f32 %v1670, %v1639
    %v1672 = vadd.f32 %v1671, %v1640
    %v1673 = vadd.f32 %v1672, %v1641
    %v1674 = vadd.f32 %v1673, %v1642
    %v1675 = vadd.f32 %v1674, %v1643
    %v1676 = vadd.f32 %v1675, %v1644
    %v1677 = vadd.f32 %v1676, %v1645
    %v1678 = vadd.f32 %v1677, %v1646
    %v1679 = vadd.f32 %v1678, %v1647
    %v1680 = vadd.f32 %v1679, %v1648
    %v1681 = vadd.f32 %v1680, %v1649
    %v1682 = vadd.f32 %v1681, %v1650
    %v1683 = vadd.f32 %v1682, %v1651
    %v1684 = vadd.f32 %v1683, %v1652
    %v1685 = vadd.f32 %v1684, %v1653
    %v1686 = vadd.f32 %v1685, %v1654
    %v1687 = vadd.f32 %v1686, %v1655
    %v1688 = vadd.f32 %v1687, %v1656
    %v1689 = vadd.f32 %v1688, %v1657
    %1690 = vadd.xlane.f32.xlu0 %v1689
    %v1691 = vpop.xlane.xlu0 %1690
    %v1692 = vmul.f32 %v36, %v36
    %v1693 = vmul.f32 %v1692, 132.0
    %v1694 = vadd.f32 %v1691, %v1693
    %v1695 = vmul.f32 %v1624, 0.00022956841
    %v1696 = vmul.f32 %v1694, 0.00022956841
    %v1697 = vmul.f32 %v1695, %v1695
    %v1698 = vsub.f32 %v1696, %v1697
    %v1699 = vadd.f32 %v1698, 1e-05
    %v1700 = vrsqrt.pop %v1699
    %1702 = vset.pattern.permute.xlu0 6
    %1703 = vperm.xlu0 %1702, %v1695
    %v1704 = vpop.permute.xlu0 %1703
    %v1706 = vsub.f32 %v1556, %v1704
    %v1707 = vsub.f32 %v1557, %v1704
    %v1708 = vsub.f32 %v1558, %v1704
    %v1709 = vsub.f32 %v1559, %v1704
    %v1710 = vsub.f32 %v1560, %v1704
    %v1711 = vsub.f32 %v1561, %v1704
    %v1712 = vsub.f32 %v1562, %v1704
    %v1713 = vsub.f32 %v1563, %v1704
    %v1714 = vsub.f32 %v1564, %v1704
    %v1715 = vsub.f32 %v1565, %v1704
    %v1716 = vsub.f32 %v1566, %v1704
    %v1717 = vsub.f32 %v1567, %v1704
    %v1718 = vsub.f32 %v1568, %v1704
    %v1719 = vsub.f32 %v1569, %v1704
    %v1720 = vsub.f32 %v1570, %v1704
    %v1721 = vsub.f32 %v1571, %v1704
    %v1722 = vsub.f32 %v1572, %v1704
    %v1723 = vsub.f32 %v1573, %v1704
    %v1724 = vsub.f32 %v1574, %v1704
    %v1725 = vsub.f32 %v1575, %v1704
    %v1726 = vsub.f32 %v1576, %v1704
    %v1727 = vsub.f32 %v1577, %v1704
    %v1728 = vsub.f32 %v1578, %v1704
    %v1729 = vsub.f32 %v1579, %v1704
    %v1730 = vsub.f32 %v1580, %v1704
    %v1731 = vsub.f32 %v1581, %v1704
    %v1732 = vsub.f32 %v1582, %v1704
    %v1733 = vsub.f32 %v1583, %v1704
    %v1734 = vsub.f32 %v1584, %v1704
    %v1735 = vsub.f32 %v1585, %v1704
    %v1736 = vsub.f32 %v1586, %v1704
    %v1737 = vsub.f32 %v1587, %v1704
    %v1738 = vsub.f32 %v1588, %v1704
    %1740 = vset.pattern.permute.xlu0 6
    %1741 = vperm.xlu0 %1740, %v1700
    %v1742 = vpop.permute.xlu0 %1741
    %v1744 = vmul.f32 %v1706, %v1742
    %v1745 = vmul.f32 %v1707, %v1742
    %v1746 = vmul.f32 %v1708, %v1742
    %v1747 = vmul.f32 %v1709, %v1742
    %v1748 = vmul.f32 %v1710, %v1742
    %v1749 = vmul.f32 %v1711, %v1742
    %v1750 = vmul.f32 %v1712, %v1742
    %v1751 = vmul.f32 %v1713, %v1742
    %v1752 = vmul.f32 %v1714, %v1742
    %v1753 = vmul.f32 %v1715, %v1742
    %v1754 = vmul.f32 %v1716, %v1742
    %v1755 = vmul.f32 %v1717, %v1742
    %v1756 = vmul.f32 %v1718, %v1742
    %v1757 = vmul.f32 %v1719, %v1742
    %v1758 = vmul.f32 %v1720, %v1742
    %v1759 = vmul.f32 %v1721, %v1742
    %v1760 = vmul.f32 %v1722, %v1742
    %v1761 = vmul.f32 %v1723, %v1742
    %v1762 = vmul.f32 %v1724, %v1742
    %v1763 = vmul.f32 %v1725, %v1742
    %v1764 = vmul.f32 %v1726, %v1742
    %v1765 = vmul.f32 %v1727, %v1742
    %v1766 = vmul.f32 %v1728, %v1742
    %v1767 = vmul.f32 %v1729, %v1742
    %v1768 = vmul.f32 %v1730, %v1742
    %v1769 = vmul.f32 %v1731, %v1742
    %v1770 = vmul.f32 %v1732, %v1742
    %v1771 = vmul.f32 %v1733, %v1742
    %v1772 = vmul.f32 %v1734, %v1742
    %v1773 = vmul.f32 %v1735, %v1742
    %v1774 = vmul.f32 %v1736, %v1742
    %v1775 = vmul.f32 %v1737, %v1742
    %v1776 = vmul.f32 %v1738, %v1742
    %1777 = vset.pattern.permute.xlu0 7
    %1778 = vperm.xlu0 %1777, %v36
    %v1779 = vpop.permute.xlu0 %1778
    %v1781 = vmul.f32 %v1779, %v1744
    %v1782 = vmul.f32 %v1779, %v1745
    %v1783 = vmul.f32 %v1779, %v1746
    %v1784 = vmul.f32 %v1779, %v1747
    %v1785 = vmul.f32 %v1779, %v1748
    %v1786 = vmul.f32 %v1779, %v1749
    %v1787 = vmul.f32 %v1779, %v1750
    %v1788 = vmul.f32 %v1779, %v1751
    %v1789 = vmul.f32 %v1779, %v1752
    %v1790 = vmul.f32 %v1779, %v1753
    %v1791 = vmul.f32 %v1779, %v1754
    %v1792 = vmul.f32 %v1779, %v1755
    %v1793 = vmul.f32 %v1779, %v1756
    %v1794 = vmul.f32 %v1779, %v1757
    %v1795 = vmul.f32 %v1779, %v1758
    %v1796 = vmul.f32 %v1779, %v1759
    %v1797 = vmul.f32 %v1779, %v1760
    %v1798 = vmul.f32 %v1779, %v1761
    %v1799 = vmul.f32 %v1779, %v1762
    %v1800 = vmul.f32 %v1779, %v1763
    %v1801 = vmul.f32 %v1779, %v1764
    %v1802 = vmul.f32 %v1779, %v1765
    %v1803 = vmul.f32 %v1779, %v1766
    %v1804 = vmul.f32 %v1779, %v1767
    %v1805 = vmul.f32 %v1779, %v1768
    %v1806 = vmul.f32 %v1779, %v1769
    %v1807 = vmul.f32 %v1779, %v1770
    %v1808 = vmul.f32 %v1779, %v1771
    %v1809 = vmul.f32 %v1779, %v1772
    %v1810 = vmul.f32 %v1779, %v1773
    %v1811 = vmul.f32 %v1779, %v1774
    %v1812 = vmul.f32 %v1779, %v1775
    %v1813 = vmul.f32 %v1779, %v1776
    %1814 = vset.pattern.permute.xlu0 8
    %1815 = vperm.xlu0 %1814, %v36
    %v1816 = vpop.permute.xlu0 %1815
    %v1818 = vadd.f32 %v1781, %v1816
    %v1819 = vadd.f32 %v1782, %v1816
    %v1820 = vadd.f32 %v1783, %v1816
    %v1821 = vadd.f32 %v1784, %v1816
    %v1822 = vadd.f32 %v1785, %v1816
    %v1823 = vadd.f32 %v1786, %v1816
    %v1824 = vadd.f32 %v1787, %v1816
    %v1825 = vadd.f32 %v1788, %v1816
    %v1826 = vadd.f32 %v1789, %v1816
    %v1827 = vadd.f32 %v1790, %v1816
    %v1828 = vadd.f32 %v1791, %v1816
    %v1829 = vadd.f32 %v1792, %v1816
    %v1830 = vadd.f32 %v1793, %v1816
    %v1831 = vadd.f32 %v1794, %v1816
    %v1832 = vadd.f32 %v1795, %v1816
    %v1833 = vadd.f32 %v1796, %v1816
    %v1834 = vadd.f32 %v1797, %v1816
    %v1835 = vadd.f32 %v1798, %v1816
    %v1836 = vadd.f32 %v1799, %v1816
    %v1837 = vadd.f32 %v1800, %v1816
    %v1838 = vadd.f32 %v1801, %v1816
    %v1839 = vadd.f32 %v1802, %v1816
    %v1840 = vadd.f32 %v1803, %v1816
    %v1841 = vadd.f32 %v1804, %v1816
    %v1842 = vadd.f32 %v1805, %v1816
    %v1843 = vadd.f32 %v1806, %v1816
    %v1844 = vadd.f32 %v1807, %v1816
    %v1845 = vadd.f32 %v1808, %v1816
    %v1846 = vadd.f32 %v1809, %v1816
    %v1847 = vadd.f32 %v1810, %v1816
    %v1848 = vadd.f32 %v1811, %v1816
    %v1849 = vadd.f32 %v1812, %v1816
    %v1850 = vadd.f32 %v1813, %v1816
    %v1851 = vmul.f32 %v1818, %v1744
    %v1852 = vmul.f32 %v1819, %v1745
    %v1853 = vmul.f32 %v1820, %v1746
    %v1854 = vmul.f32 %v1821, %v1747
    %v1855 = vmul.f32 %v1822, %v1748
    %v1856 = vmul.f32 %v1823, %v1749
    %v1857 = vmul.f32 %v1824, %v1750
    %v1858 = vmul.f32 %v1825, %v1751
    %v1859 = vmul.f32 %v1826, %v1752
    %v1860 = vmul.f32 %v1827, %v1753
    %v1861 = vmul.f32 %v1828, %v1754
    %v1862 = vmul.f32 %v1829, %v1755
    %v1863 = vmul.f32 %v1830, %v1756
    %v1864 = vmul.f32 %v1831, %v1757
    %v1865 = vmul.f32 %v1832, %v1758
    %v1866 = vmul.f32 %v1833, %v1759
    %v1867 = vmul.f32 %v1834, %v1760
    %v1868 = vmul.f32 %v1835, %v1761
    %v1869 = vmul.f32 %v1836, %v1762
    %v1870 = vmul.f32 %v1837, %v1763
    %v1871 = vmul.f32 %v1838, %v1764
    %v1872 = vmul.f32 %v1839, %v1765
    %v1873 = vmul.f32 %v1840, %v1766
    %v1874 = vmul.f32 %v1841, %v1767
    %v1875 = vmul.f32 %v1842, %v1768
    %v1876 = vmul.f32 %v1843, %v1769
    %v1877 = vmul.f32 %v1844, %v1770
    %v1878 = vmul.f32 %v1845, %v1771
    %v1879 = vmul.f32 %v1846, %v1772
    %v1880 = vmul.f32 %v1847, %v1773
    %v1881 = vmul.f32 %v1848, %v1774
    %v1882 = vmul.f32 %v1849, %v1775
    %v1883 = vmul.f32 %v1850, %v1776
    %1884 = vset.pattern.permute.xlu0 9
    %1885 = vperm.xlu0 %1884, %v36
    %v1886 = vpop.permute.xlu0 %1885
    %v1888 = vadd.f32 %v1851, %v1886
    %v1889 = vadd.f32 %v1852, %v1886
    %v1890 = vadd.f32 %v1853, %v1886
    %v1891 = vadd.f32 %v1854, %v1886
    %v1892 = vadd.f32 %v1855, %v1886
    %v1893 = vadd.f32 %v1856, %v1886
    %v1894 = vadd.f32 %v1857, %v1886
    %v1895 = vadd.f32 %v1858, %v1886
    %v1896 = vadd.f32 %v1859, %v1886
    %v1897 = vadd.f32 %v1860, %v1886
    %v1898 = vadd.f32 %v1861, %v1886
    %v1899 = vadd.f32 %v1862, %v1886
    %v1900 = vadd.f32 %v1863, %v1886
    %v1901 = vadd.f32 %v1864, %v1886
    %v1902 = vadd.f32 %v1865, %v1886
    %v1903 = vadd.f32 %v1866, %v1886
    %v1904 = vadd.f32 %v1867, %v1886
    %v1905 = vadd.f32 %v1868, %v1886
    %v1906 = vadd.f32 %v1869, %v1886
    %v1907 = vadd.f32 %v1870, %v1886
    %v1908 = vadd.f32 %v1871, %v1886
    %v1909 = vadd.f32 %v1872, %v1886
    %v1910 = vadd.f32 %v1873, %v1886
    %v1911 = vadd.f32 %v1874, %v1886
    %v1912 = vadd.f32 %v1875, %v1886
    %v1913 = vadd.f32 %v1876, %v1886
    %v1914 = vadd.f32 %v1877, %v1886
    %v1915 = vadd.f32 %v1878, %v1886
    %v1916 = vadd.f32 %v1879, %v1886
    %v1917 = vadd.f32 %v1880, %v1886
    %v1918 = vadd.f32 %v1881, %v1886
    %v1919 = vadd.f32 %v1882, %v1886
    %v1920 = vadd.f32 %v1883, %v1886
    %1921 = vst [vmem:[#allocation7] sm:$0xff] %v1888
    %1922 = vst [vmem:[#allocation7 + $0x8] sm:$0xff] %v1889
    %1923 = vst [vmem:[#allocation7 + $0x10] sm:$0xff] %v1890
    %1924 = vst [vmem:[#allocation7 + $0x18] sm:$0xff] %v1891
    %1925 = vst [vmem:[#allocation7 + $0x20] sm:$0xff] %v1892
    %1926 = vst [vmem:[#allocation7 + $0x28] sm:$0xff] %v1893
    %1927 = vst [vmem:[#allocation7 + $0x30] sm:$0xff] %v1894
    %1928 = vst [vmem:[#allocation7 + $0x38] sm:$0xff] %v1895
    %1929 = vst [vmem:[#allocation7 + $0x40] sm:$0xff] %v1896
    %1930 = vst [vmem:[#allocation7 + $0x48] sm:$0xff] %v1897
    %1931 = vst [vmem:[#allocation7 + $0x50] sm:$0xff] %v1898
    %1932 = vst [vmem:[#allocation7 + $0x58] sm:$0xff] %v1899
    %1933 = vst [vmem:[#allocation7 + $0x60] sm:$0xff] %v1900
    %1934 = vst [vmem:[#allocation7 + $0x68] sm:$0xff] %v1901
    %1935 = vst [vmem:[#allocation7 + $0x70] sm:$0xff] %v1902
    %1936 = vst [vmem:[#allocation7 + $0x78] sm:$0xff] %v1903
    %1937 = vst [vmem:[#allocation7 + $0x80] sm:$0xff] %v1904
    %1938 = vst [vmem:[#allocation7 + $0x88] sm:$0xff] %v1905
    %1939 = vst [vmem:[#allocation7 + $0x90] sm:$0xff] %v1906
    %1940 = vst [vmem:[#allocation7 + $0x98] sm:$0xff] %v1907
    %1941 = vst [vmem:[#allocation7 + $0xa0] sm:$0xff] %v1908
    %1942 = vst [vmem:[#allocation7 + $0xa8] sm:$0xff] %v1909
    %1943 = vst [vmem:[#allocation7 + $0xb0] sm:$0xff] %v1910
    %1944 = vst [vmem:[#allocation7 + $0xb8] sm:$0xff] %v1911
    %1945 = vst [vmem:[#allocation7 + $0xc0] sm:$0xff] %v1912
    %1946 = vst [vmem:[#allocation7 + $0xc8] sm:$0xff] %v1913
    %1947 = vst [vmem:[#allocation7 + $0xd0] sm:$0xff] %v1914
    %1948 = vst [vmem:[#allocation7 + $0xd8] sm:$0xff] %v1915
    %1949 = vst [vmem:[#allocation7 + $0xe0] sm:$0xff] %v1916
    %1950 = vst [vmem:[#allocation7 + $0xe8] sm:$0xff] %v1917
    %1951 = vst [vmem:[#allocation7 + $0xf0] sm:$0xff] %v1918
    %1952 = vst [vmem:[#allocation7 + $0xf8] sm:$0xff] %v1919
    %1953 = vst [vmem:[#allocation7 + $0x100] sm:$0xff] %v1920
    // Predicated region
    $region18: #{tpu_custom_call.1} parent=1 // pred_check
      _
    $region19: #{tpu_custom_call.1} parent=1 // pred_check_branch
      %1955 = sbr.rel (0) target = $region21
    $region20: #{tpu_custom_call.1} parent=1 // pred_region
      %s1957 = ssub.s32 4224, 4224
      %1958 = vsyncadd [#allocation4], %s1957
      %s1960 = sshll.u32 [#allocation7], 4
      %s1961 = int_to_ptr.vmem [resolvable:$true] %s1960
      %1963 = dma.vmem_to_hbm [thread:$0]  %s1961, 4224, %s2, [#allocation4]
    $region21: #{tpu_custom_call.1} parent=1 // pred_fallthru
      _
    // Predicated region
    $region22: #{tpu_custom_call.1} parent=1 // pred_check
      _
    $region23: #{tpu_custom_call.1} parent=1 // pred_check_branch
      %1965 = sbr.rel (0) target = $region25
    $region24: #{tpu_custom_call.1} parent=1 // pred_region
      %1966 = dma.done [#allocation4], 4224
    $region25: #{tpu_custom_call.1} parent=1 // pred_fallthru
      _
    %1967 = vsyncpa [#allocation3], 1
    %1968 = vsyncpa [#allocation6], 1
    %1969 = vsyncpa [#allocation4], 1

</llo_original>
